<compile_context>
chip_gen: v6e
topology: v6e:2x2x1
jax: 0.10.0
libtpu: 0.0.40
codegen_flags: <defaults>
</compile_context>

<pallas_src>
import jax
import jax.numpy as jnp
from jax import lax
from jax.experimental import pallas as pl
from jax.experimental.pallas import tpu as pltpu

FEAT = 2048          # fixed by x.view(-1, 2048) in NetC.forward
NUM_CLASSES = 16     # synthetic fc output dim (ImageNet checkpoint would be 1000)
LANES = 128


def _round_up(x, m):
    return ((x + m - 1) // m) * m


def _pick_tm(s):
    for cand in (512, 256, 128):
        if s % cand == 0:
            return cand
    return s  # full spatial extent as a single block (block dim == array dim is legal)


# ---------------------------- Pallas kernels ----------------------------

def _make_conv_pool_kernel(chunk, n_chunks, c_dtype):
    def kernel(a_ref, w_ref, b_ref, c_ref, pool_ref):
        # a_ref:    (1, Kp, tm) bf16     im2col patches (K on sublanes, spatial on lanes)
        # w_ref:    (tn, Kp)    bf16     conv weights (Cout rows)
        # b_ref:    (tn, 1)     f32      conv bias
        # c_ref:    (1, tn, tm) c_dtype  NCHW-layout feature tile (no transpose needed)
        # pool_ref: (1, tn, 1)  f32      per-channel spatial sums (accumulated over s)
        s_idx = pl.program_id(2)

        # Fused global-average-pool accumulator: pool block index is constant
        # across the innermost ("arbitrary") spatial axis.
        @pl.when(s_idx == 0)
        def _init():
            pool_ref[...] = jnp.zeros_like(pool_ref)

        def body(i, carry):
            off = pl.multiple_of(i * chunk, chunk)
            w_c = w_ref[pl.ds(off, chunk), :]                       # (chunk, Kp) bf16
            acc = jnp.dot(w_c, a_ref[0],
                          preferred_element_type=jnp.float32)       # (chunk, tm) f32
            acc = acc + b_ref[pl.ds(off, chunk), :]
            c_ref[0, pl.ds(off, chunk), :] = acc.astype(c_dtype)    # NCHW tile, bf16
            pool_ref[0, pl.ds(off, chunk), :] += jnp.sum(
                acc, axis=1, keepdims=True)                         # lane reduce
            return carry

        lax.fori_loop(0, n_chunks, body, 0, unroll=True)

    return kernel


def _fc_kernel(p_ref, w_ref, b_ref, o_ref):
    # p_ref: (B, 2048) f32 spatial sums; 1/S is folded into w_ref at init time.
    o_ref[...] = (
        jnp.dot(p_ref[...].astype(jnp.bfloat16), w_ref[...],
                preferred_element_type=jnp.float32)
        + b_ref[...]
    )


# ---------------------------- wrappers ----------------------------

def conv3x3_pool(x_nchw, conv_w_p, conv_b_p, *, tn=256, chunk=128,
                 c_dtype=jnp.bfloat16):
    """3x3 conv (stride 1, pad 1) + fused global average pool.

    Returns (C in NCHW `c_dtype`, per-channel spatial sums (B, Cout) f32).
    """
    B, Cin, H, W = x_nchw.shape
    Cout, Kp = conv_w_p.shape
    S = H * W
    K = 9 * Cin
    assert Kp == _round_up(K, LANES)
    assert Cout % tn == 0 and tn % chunk == 0
    tm = _pick_tm(S)
    assert S % tm == 0

    # --- XLA glue: zero-pad + 9-tap im2col directly in (B, K, S) layout ---
    xp = jnp.pad(x_nchw, ((0, 0), (0, 0), (1, 1), (1, 1)))
    patches = jnp.concatenate(
        [xp[:, :, dh:dh + H, dw:dw + W] for dh in range(3) for dw in range(3)],
        axis=1)                                            # (B, 9*Cin, H, W)
    a = patches.reshape(B, K, S)
    a = jnp.pad(a, ((0, 0), (0, Kp - K), (0, 0))).astype(jnp.bfloat16)

    grid = (B, Cout // tn, S // tm)   # (batch, Cout tiles, spatial tiles)
    kernel = _make_conv_pool_kernel(chunk, tn // chunk, c_dtype)

    c_flat, pool_sums = pl.pallas_call(
        kernel,
        out_shape=(
            jax.ShapeDtypeStruct((B, Cout, S), c_dtype),      # C, NCHW-flat
            jax.ShapeDtypeStruct((B, Cout, 1), jnp.float32),  # spatial sums
        ),
        grid=grid,
        in_specs=[
            pl.BlockSpec((1, Kp, tm), lambda b, j, s: (b, 0, s)),
            pl.BlockSpec((tn, Kp),    lambda b, j, s: (j, 0)),
            pl.BlockSpec((tn, 1),     lambda b, j, s: (j, 0)),
        ],
        out_specs=(
            pl.BlockSpec((1, tn, tm), lambda b, j, s: (b, j, s)),
            pl.BlockSpec((1, tn, 1),  lambda b, j, s: (b, j, 0)),
        ),
        compiler_params=pltpu.CompilerParams(
            dimension_semantics=("parallel", "parallel", "arbitrary"),
            vmem_limit_bytes=32 * 1024 * 1024,
        ),
    )(a, conv_w_p, conv_b_p)

    C = c_flat.reshape(B, Cout, H, W)           # free reshape, already NCHW
    pool_sums = pool_sums.reshape(B, Cout)      # free squeeze
    return C, pool_sums


def fc_head(pool_sums, fc_w_p, fc_b_p):
    """fc on the pooled vector; avgpool 1/S scale is pre-folded into fc_w_p."""
    B = pool_sums.shape[0]
    n_pad = fc_w_p.shape[1]
    out = pl.pallas_call(
        _fc_kernel,
        out_shape=jax.ShapeDtypeStruct((B, n_pad), jnp.float32),
    )(pool_sums, fc_w_p, fc_b_p)
    return out[:, :NUM_CLASSES]


def netc_forward(x_nchw, params):
    C, pool_sums = conv3x3_pool(x_nchw, params["conv_w_p"], params["conv_b_p"])
    logits = fc_head(pool_sums, params["fc_w_p"], params["fc_b_p"])
    return logits, C


def init_params(key, cin, spatial_size):
    k1, k2, k3, k4 = jax.random.split(key, 4)
    conv_w = 0.05 * jax.random.normal(k1, (3, 3, cin, FEAT), jnp.float32)
    conv_b = 0.01 * jax.random.normal(k2, (FEAT,), jnp.float32)
    # PyTorch fc weight is (NUM_CLASSES, 2048); keep the transposed matmul form.
    fc_w_t = 0.02 * jax.random.normal(k3, (FEAT, NUM_CLASSES), jnp.float32)
    fc_b = 0.01 * jax.random.normal(k4, (NUM_CLASSES,), jnp.float32)

    # --- hoisted constant prep (done once, not per forward) ---
    K = 9 * cin
    Kp = _round_up(K, LANES)
    conv_w_p = jnp.pad(conv_w.reshape(K, FEAT).T,           # (Cout, K)
                       ((0, 0), (0, Kp - K))).astype(jnp.bfloat16)
    conv_b_p = conv_b.reshape(FEAT, 1).astype(jnp.float32)  # (Cout, 1)

    n_pad = _round_up(NUM_CLASSES, LANES)
    inv_s = 1.0 / float(spatial_size)
    fc_w_p = (jnp.zeros((FEAT, n_pad), jnp.float32)
              .at[:, :NUM_CLASSES].set(fc_w_t * inv_s)).astype(jnp.bfloat16)
    fc_b_p = jnp.zeros((1, n_pad), jnp.float32).at[:, :NUM_CLASSES].set(
        fc_b[None, :])

    return {
        "conv_w": conv_w, "conv_b": conv_b, "fc_w_t": fc_w_t, "fc_b": fc_b,
        "conv_w_p": conv_w_p, "conv_b_p": conv_b_p,
        "fc_w_p": fc_w_p, "fc_b_p": fc_b_p,
    }


if __name__ == "__main__":
    key = jax.random.PRNGKey(0)
    kx, kp = jax.random.split(key)

    B, CIN, H, W = 2, 4, 16, 16                        # small NCHW input
    x = jax.random.normal(kx, (B, CIN, H, W), jnp.float32)
    params = init_params(kp, CIN, H * W)

    logits, C = jax.jit(netc_forward)(x, params)
    jax.block_until_ready((logits, C))

    assert logits.shape == (B, NUM_CLASSES)
    assert C.shape == (B, FEAT, H, W)

    # --- reference check: conv (bf16 MXU inputs + bf16 C -> loose tolerance) ---
    C_ref = lax.conv_general_dilated(
        x, params["conv_w"], window_strides=(1, 1), padding=((1, 1), (1, 1)),
        dimension_numbers=("NCHW", "HWIO", "NCHW"),
        precision=lax.Precision.HIGHEST,
    ) + params["conv_b"][None, :, None, None]
    assert jnp.allclose(C.astype(jnp.float32), C_ref, atol=3e-2, rtol=3e-2)

    # --- reference check: head (pool + fc) against the returned C ---
    pooled_ref = jnp.mean(C.astype(jnp.float32), axis=(2, 3))     # (B, 2048)
    logits_ref = jnp.dot(pooled_ref, params["fc_w_t"],
                         precision=lax.Precision.HIGHEST) + params["fc_b"]
    assert jnp.allclose(logits, logits_ref, atol=1e-2, rtol=1e-2)

    print("KERNEL_OK")
</pallas_src>

<mosaic_0001>
module attributes {stable_mosaic.version = 11 : i64} {
  func.func @kernel(%arg0: i32, %arg1: i32, %arg2: i32, %arg3: memref<1x128x256xbf16, #tpu.memory_space<vmem>>, %arg4: memref<256x128xbf16, #tpu.memory_space<vmem>>, %arg5: memref<256x1xf32, #tpu.memory_space<vmem>>, %arg6: memref<1x256x256xbf16, #tpu.memory_space<vmem>>, %arg7: memref<1x256x1xf32, #tpu.memory_space<vmem>>) attributes {dimension_semantics = [#tpu.dimension_semantics<parallel>, #tpu.dimension_semantics<parallel>, #tpu.dimension_semantics<arbitrary>], iteration_bounds = array<i64: 2, 8, 1>, scalar_prefetch = 0 : i64, scratch_operands = 0 : i64, tpu.core_type = #tpu.core_type<tc>, window_params = [{transform_indices = @transform_0, window_bounds = array<i64: 1, 128, 256>}, {transform_indices = @transform_1, window_bounds = array<i64: 256, 128>}, {transform_indices = @transform_2, window_bounds = array<i64: 256, 1>}, {transform_indices = @transform_3, window_bounds = array<i64: 1, 256, 256>}, {transform_indices = @transform_4, window_bounds = array<i64: 1, 256, 1>}]} {
    %c0_i32 = arith.constant 0 : i32
    %0 = arith.cmpi eq, %arg2, %c0_i32 : i32
    %1 = arith.extui %0 : i1 to i32
    %c0_i32_0 = arith.constant 0 : i32
    %2 = arith.cmpi ne, %1, %c0_i32_0 : i32
    scf.if %2 {
      %cst_27 = arith.constant 0.000000e+00 : f32
      %55 = vector.broadcast %cst_27 : f32 to vector<1x256x1xf32>
      %c0_28 = arith.constant 0 : index
      %c0_29 = arith.constant 0 : index
      %c0_30 = arith.constant 0 : index
      %56 = vector.load %arg7[%c0_28, %c0_29, %c0_30] : memref<1x256x1xf32, #tpu.memory_space<vmem>>, vector<1x256x1xf32>
      tpu.vector_store %arg7[%c0_28, %c0_29, %c0_30], %55 {strides = array<i32>} : memref<1x256x1xf32, #tpu.memory_space<vmem>>, vector<1x256x1xf32>,
    } else {
    }
    %c0_i32_1 = arith.constant 0 : i32
    %c128_i32 = arith.constant 128 : i32
    %3 = arith.muli %c0_i32_1, %c128_i32 : i32
    %4 = tpu.assume_multiple %3, 128 : i32
    %5 = arith.index_cast %4 : i32 to index
    %c0 = arith.constant 0 : index
    %6 = vector.load %arg4[%5, %c0] : memref<256x128xbf16, #tpu.memory_space<vmem>>, vector<128x128xbf16>
    %c0_2 = arith.constant 0 : index
    %c0_3 = arith.constant 0 : index
    %c0_4 = arith.constant 0 : index
    %7 = vector.load %arg3[%c0_2, %c0_3, %c0_4] : memref<1x128x256xbf16, #tpu.memory_space<vmem>>, vector<1x128x256xbf16>
    %8 = vector.shape_cast %7 : vector<1x128x256xbf16> to vector<128x256xbf16>
    %cst = arith.constant dense<0.000000e+00> : vector<128x256xf32>
    %9 = tpu.matmul %6, %8, %cst {dimension_numbers = #tpu.dot_dimension_numbers<[1], [0], [0], [1], [0, 0, 1, 1], [], []>} : vector<128x128xbf16>, vector<128x256xbf16>, vector<128x256xf32> -> vector<128x256xf32>
    %10 = arith.index_cast %4 : i32 to index
    %c0_5 = arith.constant 0 : index
    %11 = vector.load %arg5[%10, %c0_5] : memref<256x1xf32, #tpu.memory_space<vmem>>, vector<128x1xf32>
    %12 = vector.broadcast %11 : vector<128x1xf32> to vector<128x256xf32>
    %13 = arith.addf %9, %12 : vector<128x256xf32>
    %14 = arith.truncf %13 : vector<128x256xf32> to vector<128x256xbf16>
    %c0_6 = arith.constant 0 : index
    %15 = arith.index_cast %4 : i32 to index
    %c0_7 = arith.constant 0 : index
    %16 = vector.load %arg6[%c0_6, %15, %c0_7] : memref<1x256x256xbf16, #tpu.memory_space<vmem>>, vector<1x128x256xbf16>
    %17 = vector.shape_cast %16 : vector<1x128x256xbf16> to vector<128x256xbf16>
    %18 = vector.shape_cast %14 : vector<128x256xbf16> to vector<1x128x256xbf16>
    tpu.vector_store %arg6[%c0_6, %15, %c0_7], %18 {strides = array<i32>} : memref<1x256x256xbf16, #tpu.memory_space<vmem>>, vector<1x128x256xbf16>,
    %c0_8 = arith.constant 0 : index
    %19 = arith.index_cast %4 : i32 to index
    %c0_9 = arith.constant 0 : index
    %20 = vector.load %arg7[%c0_8, %19, %c0_9] : memref<1x256x1xf32, #tpu.memory_space<vmem>>, vector<1x128x1xf32>
    %21 = vector.shape_cast %20 : vector<1x128x1xf32> to vector<128x1xf32>
    %cst_10 = arith.constant dense<0.000000e+00> : vector<128xf32>
    %22 = vector.multi_reduction <add>, %13, %cst_10 [1] : vector<128x256xf32> to vector<128xf32>
    %23 = vector.shape_cast %22 : vector<128xf32> to vector<128x1xf32>
    %24 = arith.addf %21, %23 : vector<128x1xf32>
    %c0_11 = arith.constant 0 : index
    %25 = arith.index_cast %4 : i32 to index
    %c0_12 = arith.constant 0 : index
    %26 = vector.load %arg7[%c0_11, %25, %c0_12] : memref<1x256x1xf32, #tpu.memory_space<vmem>>, vector<1x128x1xf32>
    %27 = vector.shape_cast %26 : vector<1x128x1xf32> to vector<128x1xf32>
    %28 = vector.shape_cast %24 : vector<128x1xf32> to vector<1x128x1xf32>
    tpu.vector_store %arg7[%c0_11, %25, %c0_12], %28 {strides = array<i32>} : memref<1x256x1xf32, #tpu.memory_space<vmem>>, vector<1x128x1xf32>,
    %c1_i32 = arith.constant 1 : i32
    %c128_i32_13 = arith.constant 128 : i32
    %29 = arith.muli %c1_i32, %c128_i32_13 : i32
    %30 = tpu.assume_multiple %29, 128 : i32
    %31 = arith.index_cast %30 : i32 to index
    %c0_14 = arith.constant 0 : index
    %32 = vector.load %arg4[%31, %c0_14] : memref<256x128xbf16, #tpu.memory_space<vmem>>, vector<128x128xbf16>
    %c0_15 = arith.constant 0 : index
    %c0_16 = arith.constant 0 : index
    %c0_17 = arith.constant 0 : index
    %33 = vector.load %arg3[%c0_15, %c0_16, %c0_17] : memref<1x128x256xbf16, #tpu.memory_space<vmem>>, vector<1x128x256xbf16>
    %34 = vector.shape_cast %33 : vector<1x128x256xbf16> to vector<128x256xbf16>
    %cst_18 = arith.constant dense<0.000000e+00> : vector<128x256xf32>
    %35 = tpu.matmul %32, %34, %cst_18 {dimension_numbers = #tpu.dot_dimension_numbers<[1], [0], [0], [1], [0, 0, 1, 1], [], []>} : vector<128x128xbf16>, vector<128x256xbf16>, vector<128x256xf32> -> vector<128x256xf32>
    %36 = arith.index_cast %30 : i32 to index
    %c0_19 = arith.constant 0 : index
    %37 = vector.load %arg5[%36, %c0_19] : memref<256x1xf32, #tpu.memory_space<vmem>>, vector<128x1xf32>
    %38 = vector.broadcast %37 : vector<128x1xf32> to vector<128x256xf32>
    %39 = arith.addf %35, %38 : vector<128x256xf32>
    %40 = arith.truncf %39 : vector<128x256xf32> to vector<128x256xbf16>
    %c0_20 = arith.constant 0 : index
    %41 = arith.index_cast %30 : i32 to index
    %c0_21 = arith.constant 0 : index
    %42 = vector.load %arg6[%c0_20, %41, %c0_21] : memref<1x256x256xbf16, #tpu.memory_space<vmem>>, vector<1x128x256xbf16>
    %43 = vector.shape_cast %42 : vector<1x128x256xbf16> to vector<128x256xbf16>
    %44 = vector.shape_cast %40 : vector<128x256xbf16> to vector<1x128x256xbf16>
    tpu.vector_store %arg6[%c0_20, %41, %c0_21], %44 {strides = array<i32>} : memref<1x256x256xbf16, #tpu.memory_space<vmem>>, vector<1x128x256xbf16>,
    %c0_22 = arith.constant 0 : index
    %45 = arith.index_cast %30 : i32 to index
    %c0_23 = arith.constant 0 : index
    %46 = vector.load %arg7[%c0_22, %45, %c0_23] : memref<1x256x1xf32, #tpu.memory_space<vmem>>, vector<1x128x1xf32>
    %47 = vector.shape_cast %46 : vector<1x128x1xf32> to vector<128x1xf32>
    %cst_24 = arith.constant dense<0.000000e+00> : vector<128xf32>
    %48 = vector.multi_reduction <add>, %39, %cst_24 [1] : vector<128x256xf32> to vector<128xf32>
    %49 = vector.shape_cast %48 : vector<128xf32> to vector<128x1xf32>
    %50 = arith.addf %47, %49 : vector<128x1xf32>
    %c0_25 = arith.constant 0 : index
    %51 = arith.index_cast %30 : i32 to index
    %c0_26 = arith.constant 0 : index
    %52 = vector.load %arg7[%c0_25, %51, %c0_26] : memref<1x256x1xf32, #tpu.memory_space<vmem>>, vector<1x128x1xf32>
    %53 = vector.shape_cast %52 : vector<1x128x1xf32> to vector<128x1xf32>
    %54 = vector.shape_cast %50 : vector<128x1xf32> to vector<1x128x1xf32>
    tpu.vector_store %arg7[%c0_25, %51, %c0_26], %54 {strides = array<i32>} : memref<1x256x1xf32, #tpu.memory_space<vmem>>, vector<1x128x1xf32>,
    %c2_i32 = arith.constant 2 : i32
    return
  }
  func.func @transform_0(%arg0: i32, %arg1: i32, %arg2: i32) -> (i32, i32, i32) {
    %c0_i32 = arith.constant 0 : i32
    %c0_i32_0 = arith.constant 0 : i32
    return %arg0, %c0_i32, %arg2 : i32, i32, i32
  }
  func.func @transform_1(%arg0: i32, %arg1: i32, %arg2: i32) -> (i32, i32) {
    %c0_i32 = arith.constant 0 : i32
    %c0_i32_0 = arith.constant 0 : i32
    return %arg1, %c0_i32 : i32, i32
  }
  func.func @transform_2(%arg0: i32, %arg1: i32, %arg2: i32) -> (i32, i32) {
    %c0_i32 = arith.constant 0 : i32
    %c0_i32_0 = arith.constant 0 : i32
    return %arg1, %c0_i32 : i32, i32
  }
  func.func @transform_3(%arg0: i32, %arg1: i32, %arg2: i32) -> (i32, i32, i32) {
    %c0_i32 = arith.constant 0 : i32
    return %arg0, %arg1, %arg2 : i32, i32, i32
  }
  func.func @transform_4(%arg0: i32, %arg1: i32, %arg2: i32) -> (i32, i32, i32) {
    %c0_i32 = arith.constant 0 : i32
    %c0_i32_0 = arith.constant 0 : i32
    return %arg0, %arg1, %c0_i32 : i32, i32, i32
  }
}

module attributes {stable_mosaic.version = 11 : i64} {
  func.func @_fc_kernel(%arg0: memref<2x2048xf32, #tpu.memory_space<vmem>>, %arg1: memref<2048x128xbf16, #tpu.memory_space<vmem>>, %arg2: memref<1x128xf32, #tpu.memory_space<vmem>>, %arg3: memref<2x128xf32, #tpu.memory_space<vmem>>) attributes {dimension_semantics = [], scalar_prefetch = 0 : i64, scratch_operands = 0 : i64, tpu.core_type = #tpu.core_type<tc>} {
    %c0 = arith.constant 0 : index
    %c0_0 = arith.constant 0 : index
    %0 = vector.load %arg0[%c0, %c0_0] : memref<2x2048xf32, #tpu.memory_space<vmem>>, vector<2x2048xf32>
    %1 = arith.truncf %0 : vector<2x2048xf32> to vector<2x2048xbf16>
    %c0_1 = arith.constant 0 : index
    %c0_2 = arith.constant 0 : index
    %2 = vector.load %arg1[%c0_1, %c0_2] : memref<2048x128xbf16, #tpu.memory_space<vmem>>, vector<2048x128xbf16>
    %cst = arith.constant dense<0.000000e+00> : vector<2x128xf32>
    %3 = tpu.matmul %1, %2, %cst {dimension_numbers = #tpu.dot_dimension_numbers<[1], [0], [0], [1], [0, 0, 1, 1], [], []>} : vector<2x2048xbf16>, vector<2048x128xbf16>, vector<2x128xf32> -> vector<2x128xf32>
    %c0_3 = arith.constant 0 : index
    %c0_4 = arith.constant 0 : index
    %4 = vector.load %arg2[%c0_3, %c0_4] : memref<1x128xf32, #tpu.memory_space<vmem>>, vector<1x128xf32>
    %5 = vector.broadcast %4 : vector<1x128xf32> to vector<2x128xf32>
    %6 = arith.addf %3, %5 : vector<2x128xf32>
    %c0_5 = arith.constant 0 : index
    %c0_6 = arith.constant 0 : index
    %7 = vector.load %arg3[%c0_5, %c0_6] : memref<2x128xf32, #tpu.memory_space<vmem>>, vector<2x128xf32>
    tpu.vector_store %arg3[%c0_5, %c0_6], %6 {strides = array<i32>} : memref<2x128xf32, #tpu.memory_space<vmem>>, vector<2x128xf32>,
    return
  }
}

</mosaic_0001>

<llo_original>
// kernel: netc_forward.2
$region0: #{netc_forward.2}
  #allocation0 [shape = 'u32[]', space=smem, size = 0x4, offset = 0x4, fixed_abs, tag = 'smem constant byte address 0x4 - core index']
  #allocation1 [shape = 'u32[144,128]{1,0:T(1,128)}', space=vmem, size = 0x12000, scoped, tag = 'internal scratch']
  %s0 = inlined_call_operand.vmem [shape: bf16[2,128,256], index: 0, kind: input, shape index: {}]
  %s1 = inlined_call_operand.vmem [shape: bf16[2048,128], index: 1, kind: input, shape index: {}]
  %s2 = inlined_call_operand.vmem [shape: f32[2048,1], index: 2, kind: input, shape index: {}]
  %s3 = inlined_call_operand.vmem [shape: bf16[2,2048,256], index: 3, kind: output, shape index: {0}]
  %s4 = inlined_call_operand.vmem [shape: f32[2,2048,1], index: 4, kind: output, shape index: {1}]
  %5 = xla_tuple %s3, %s4
  %s6 = sld [smem:[#allocation0]]
  $region57: #{netc_forward.2} parent=0
    _
  %s8 = ssub.s32 1, %s6
  %s9 = scalar_select 0, %s8, %s6
  loop: start=0, step=1, limit=18
  $region2: #{netc_forward.2} parent=0 // loop_pre_header
    _
  $region3: #{netc_forward.2} parent=0 // loop_header
    %s11 = sphi 0, %s15
    %p12 = scmp.ge.s32.totalorder %s11, 18
    %s18 = sphi 0, %s37
    %s19 = sphi 0, %s33
    %s20 = sphi 0, %s29
    %s21 = sphi 0, %s18
    %s22 = sphi 0, %s19
    %s23 = sphi 0, %s20
    %s24 = sphi 0, %s21
    %s25 = sphi 0, %s22
    %s26 = sphi 0, %s23
    %s42 = sphi 0, %s44
    %s45 = sphi 0, %s42
    %s46 = sphi 0, %s45
    %s62 = sphi 0, %s46
    %s68 = sphi 0, %s70
    %s71 = sphi 0, %s68
    %s72 = sphi 0, %s71
    %s88 = sphi 0, %s72
    %s94 = sphi 0, %s96
    %s97 = sphi 0, %s94
    %s98 = sphi 0, %s97
    %s114 = sphi 0, %s98
    %s124 = sphi 0, %s126
    %s127 = sphi 0, %s124
    %s128 = sphi 0, %s127
    %s144 = sphi 0, %s128
    %s152 = sphi 0, %s154
    %s155 = sphi 0, %s152
    %s156 = sphi 0, %s155
    %s172 = sphi 0, %s156
  $region4: #{netc_forward.2} parent=0 // loop_header_branch
    %14 = sbr.rel (%p12) target = $region8
  $region5: #{netc_forward.2} parent=0 // loop_body
    %s16 = ssub.s32 %s11, 1
    %s17 = ssub.s32 %s11, 2
    %s27 = sadd.s32 1, %s20
    %p28 = scmp.ge.s32.totalorder %s27, 1
    %s29 = scalar_select %p28, 0, %s27
    %s30 = sadd.s32 1, %s19
    %s31 = scalar_select %p28, %s30, %s19
    %p32 = scmp.ge.s32.totalorder %s31, 8
    %s33 = scalar_select %p32, 0, %s31
    %s34 = sadd.s32 1, %s18
    %s35 = scalar_select %p32, %s34, %s18
    %p36 = scmp.ge.s32.totalorder %s35, 2
    %s37 = scalar_select %p36, 0, %s35
    %s38 = ssub.s32 %s18, %s37
    %s39 = ssub.s32 %s20, %s29
    %s40 = sor.u32 %s38, %s39
    %p41 = scmp.eq.s32.totalorder %s40, 0
    %s43 = sadd.s32 %s42, 1
    %s44 = scalar_select %p41, %s42, %s43
    %p47 = pneg %p41
    %p48 = scmp.eq.s32.totalorder %s11, 15
    %p49 = por %p47, %p48
    %p50 = scmp.ne.s32.totalorder %s42, %s45
    %p51 = scmp.eq.s32.totalorder %s11, 0
    %p52 = por %p50, %p51
    %p53 = scmp.ne.s32.totalorder %s42, %s45
    %p54 = scmp.eq.s32.totalorder %s16, 15
    %p55 = por %p53, %p54
    %p56 = scmp.ne.s32.totalorder %s45, %s46
    %p57 = scmp.eq.s32.totalorder %s16, 0
    %p58 = por %p56, %p57
    %p59 = scmp.ne.s32.totalorder %s45, %s46
    %p60 = scmp.eq.s32.totalorder %s17, 15
    %p61 = por %p59, %p60
    %p63 = scmp.ne.s32.totalorder %s46, %s62
    %p64 = scmp.eq.s32.totalorder %s17, 0
    %p65 = por %p63, %p64
    %s66 = ssub.s32 %s19, %s33
    %p67 = scmp.eq.s32.totalorder %s66, 0
    %s69 = sadd.s32 %s68, 1
    %s70 = scalar_select %p67, %s68, %s69
    %p73 = pneg %p67
    %p74 = scmp.eq.s32.totalorder %s11, 15
    %p75 = por %p73, %p74
    %p76 = scmp.ne.s32.totalorder %s68, %s71
    %p77 = scmp.eq.s32.totalorder %s11, 0
    %p78 = por %p76, %p77
    %p79 = scmp.ne.s32.totalorder %s68, %s71
    %p80 = scmp.eq.s32.totalorder %s16, 15
    %p81 = por %p79, %p80
    %p82 = scmp.ne.s32.totalorder %s71, %s72
    %p83 = scmp.eq.s32.totalorder %s16, 0
    %p84 = por %p82, %p83
    %p85 = scmp.ne.s32.totalorder %s71, %s72
    %p86 = scmp.eq.s32.totalorder %s17, 15
    %p87 = por %p85, %p86
    %p89 = scmp.ne.s32.totalorder %s72, %s88
    %p90 = scmp.eq.s32.totalorder %s17, 0
    %p91 = por %p89, %p90
    %s92 = ssub.s32 %s19, %s33
    %p93 = scmp.eq.s32.totalorder %s92, 0
    %s95 = sadd.s32 %s94, 1
    %s96 = scalar_select %p93, %s94, %s95
    %p99 = pneg %p93
    %p100 = scmp.eq.s32.totalorder %s11, 15
    %p101 = por %p99, %p100
    %p102 = scmp.ne.s32.totalorder %s94, %s97
    %p103 = scmp.eq.s32.totalorder %s11, 0
    %p104 = por %p102, %p103
    %p105 = scmp.ne.s32.totalorder %s94, %s97
    %p106 = scmp.eq.s32.totalorder %s16, 15
    %p107 = por %p105, %p106
    %p108 = scmp.ne.s32.totalorder %s97, %s98
    %p109 = scmp.eq.s32.totalorder %s16, 0
    %p110 = por %p108, %p109
    %p111 = scmp.ne.s32.totalorder %s97, %s98
    %p112 = scmp.eq.s32.totalorder %s17, 15
    %p113 = por %p111, %p112
    %p115 = scmp.ne.s32.totalorder %s98, %s114
    %p116 = scmp.eq.s32.totalorder %s17, 0
    %p117 = por %p115, %p116
    %s118 = ssub.s32 %s18, %s37
    %s119 = ssub.s32 %s19, %s33
    %s120 = sor.u32 %s118, %s119
    %s121 = ssub.s32 %s20, %s29
    %s122 = sor.u32 %s120, %s121
    %p123 = scmp.eq.s32.totalorder %s122, 0
    %s125 = sadd.s32 %s124, 1
    %s126 = scalar_select %p123, %s124, %s125
    %p129 = pneg %p123
    %p130 = scmp.eq.s32.totalorder %s11, 15
    %p131 = por %p129, %p130
    %p132 = scmp.ne.s32.totalorder %s124, %s127
    %p133 = scmp.eq.s32.totalorder %s11, 0
    %p134 = por %p132, %p133
    %p135 = scmp.ne.s32.totalorder %s124, %s127
    %p136 = scmp.eq.s32.totalorder %s16, 15
    %p137 = por %p135, %p136
    %p138 = scmp.ne.s32.totalorder %s127, %s128
    %p139 = scmp.eq.s32.totalorder %s16, 0
    %p140 = por %p138, %p139
    %p141 = scmp.ne.s32.totalorder %s127, %s128
    %p142 = scmp.eq.s32.totalorder %s17, 15
    %p143 = por %p141, %p142
    %p145 = scmp.ne.s32.totalorder %s128, %s144
    %p146 = scmp.eq.s32.totalorder %s17, 0
    %p147 = por %p145, %p146
    %s148 = ssub.s32 %s18, %s37
    %s149 = ssub.s32 %s19, %s33
    %s150 = sor.u32 %s148, %s149
    %p151 = scmp.eq.s32.totalorder %s150, 0
    %s153 = sadd.s32 %s152, 1
    %s154 = scalar_select %p151, %s152, %s153
    %p157 = pneg %p151
    %p158 = scmp.eq.s32.totalorder %s11, 15
    %p159 = por %p157, %p158
    %p160 = scmp.ne.s32.totalorder %s152, %s155
    %p161 = scmp.eq.s32.totalorder %s11, 0
    %p162 = por %p160, %p161
    %p163 = scmp.ne.s32.totalorder %s152, %s155
    %p164 = scmp.eq.s32.totalorder %s16, 15
    %p165 = por %p163, %p164
    %p166 = scmp.ne.s32.totalorder %s155, %s156
    %p167 = scmp.eq.s32.totalorder %s16, 0
    %p168 = por %p166, %p167
    %p169 = scmp.ne.s32.totalorder %s155, %s156
    %p170 = scmp.eq.s32.totalorder %s17, 15
    %p171 = por %p169, %p170
    %p173 = scmp.ne.s32.totalorder %s156, %s172
    %p174 = scmp.eq.s32.totalorder %s17, 0
    %p175 = por %p173, %p174
    %p176 = scmp.le.s32.totalorder 1, %s11
    %p177 = scmp.lt.s32.totalorder %s11, 17
    %p178 = pnand %p176, %p177
    %p179 = pneg %p178
    // Predicated region
    $region9: #{netc_forward.2} parent=5 // pred_check
      _
    $region10: #{netc_forward.2} parent=5 // pred_check_branch
      %181 = sbr.rel (%p178) target = $region12
    $region11: #{netc_forward.2} parent=5 // pred_region
      %s182 = ssub.s32 %s11, 1
    $region12: #{netc_forward.2} parent=5 // pred_fallthru
      _
    %p183 = scmp.lt.s32.totalorder %s11, 16
    // Predicated region
    $region13: #{netc_forward.2} parent=5 // pred_check
      %p184 = pneg %p183
    $region14: #{netc_forward.2} parent=5 // pred_check_branch
      %186 = sbr.rel (%p184) target = $region16
    $region15: #{netc_forward.2} parent=5 // pred_region
      // Predicated region
      $region17: #{netc_forward.2} parent=15 // pred_check
        %p187 = pneg %p52
      $region18: #{netc_forward.2} parent=15 // pred_check_branch
        %189 = sbr.rel (%p187) target = $region20
      $region19: #{netc_forward.2} parent=15 // pred_region
        %s190 = smul.u32 2, %s20
        %p191 = scmp.lt.s32.totalorder %s18, 1
        %s192 = scalar_select %p191, %s18, 1
        %p193 = scmp.lt.s32.totalorder %s190, 1
        %s194 = scalar_select %p193, %s190, 1
        %s195 = smul.addr %s192, 32
        %s196 = sadd.s32 %s194, %s195
        %s197 = smul.addr %s196, 4
        %s198 = scalar_lea.vmem %s0, %s197
        %s199 = smul.u32 2, %s20
      $region20: #{netc_forward.2} parent=15 // pred_fallthru
        _
      // Predicated region
      $region21: #{netc_forward.2} parent=15 // pred_check
        %p200 = pneg %p78
      $region22: #{netc_forward.2} parent=15 // pred_check_branch
        %202 = sbr.rel (%p200) target = $region24
      $region23: #{netc_forward.2} parent=15 // pred_region
        %s203 = smul.u32 32, %s19
        %p204 = scmp.lt.s32.totalorder %s203, 255
        %s205 = scalar_select %p204, %s203, 255
        %s206 = smul.addr %s205, 4
        %s207 = scalar_lea.vmem %s1, %s206
        %s208 = smul.u32 32, %s19
      $region24: #{netc_forward.2} parent=15 // pred_fallthru
        _
      // Predicated region
      $region25: #{netc_forward.2} parent=15 // pred_check
        %p209 = pneg %p104
      $region26: #{netc_forward.2} parent=15 // pred_check_branch
        %211 = sbr.rel (%p209) target = $region28
      $region27: #{netc_forward.2} parent=15 // pred_region
        %s212 = smul.u32 32, %s19
        %p213 = scmp.lt.s32.totalorder %s212, 255
        %s214 = scalar_select %p213, %s212, 255
        %s215 = smul.addr %s214, 8
        %s216 = scalar_lea.vmem %s2, %s215
        %s217 = smul.u32 32, %s19
      $region28: #{netc_forward.2} parent=15 // pred_fallthru
        _
    $region16: #{netc_forward.2} parent=5 // pred_fallthru
      _
    %p218 = scmp.le.s32.totalorder 1, %s11
    %p219 = scmp.lt.s32.totalorder %s11, 17
    %p220 = pnand %p218, %p219
    %p221 = pneg %p220
    // Predicated region
    $region29: #{netc_forward.2} parent=5 // pred_check
      _
    $region30: #{netc_forward.2} parent=5 // pred_check_branch
      %223 = sbr.rel (%p220) target = $region32
    $region31: #{netc_forward.2} parent=5 // pred_region
      %s224 = ssub.s32 %s11, 1
      %s225 = smul.u32 2, %s23
      %p226 = scmp.lt.s32.totalorder %s21, 1
      %s227 = scalar_select %p226, %s21, 1
      %p228 = scmp.lt.s32.totalorder %s225, 1
      %s229 = scalar_select %p228, %s225, 1
      %s230 = smul.addr %s227, 32
      %s231 = sadd.s32 %s229, %s230
      %s232 = smul.addr %s231, 4
      %s233 = scalar_lea.vmem %s0, %s232
      %p234 = pneg %p58
      %p235 = pneg %p55
      %s236 = smul.u32 32, %s22
      %p237 = scmp.lt.s32.totalorder %s236, 255
      %s238 = scalar_select %p237, %s236, 255
      %s239 = smul.addr %s238, 4
      %s240 = scalar_lea.vmem %s1, %s239
      %p241 = pneg %p84
      %p242 = pneg %p81
      %s243 = smul.u32 32, %s22
      %p244 = scmp.lt.s32.totalorder %s243, 255
      %s245 = scalar_select %p244, %s243, 255
      %s246 = smul.addr %s245, 8
      %s247 = scalar_lea.vmem %s2, %s246
      %p248 = pneg %p110
      %p249 = pneg %p107
      %p250 = pneg %p140
      %p251 = pneg %p137
      %s252 = smul.u32 32, %s22
      %s253 = smul.u32 2, %s23
      %p254 = scmp.lt.s32.totalorder %s21, 1
      %s255 = scalar_select %p254, %s21, 1
      %p256 = scmp.lt.s32.totalorder %s252, 255
      %s257 = scalar_select %p256, %s252, 255
      %p258 = scmp.lt.s32.totalorder %s253, 1
      %s259 = scalar_select %p258, %s253, 1
      %s260 = smul.addr %s257, 2
      %s261 = sadd.s32 %s259, %s260
      %s262 = smul.addr %s255, 512
      %s263 = sadd.s32 %s261, %s262
      %s264 = smul.addr %s263, 4
      %s265 = scalar_lea.vmem %s3, %s264
      %p266 = pneg %p168
      %p267 = pneg %p165
      %s268 = smul.u32 32, %s22
      %p269 = scmp.lt.s32.totalorder %s21, 1
      %s270 = scalar_select %p269, %s21, 1
      %p271 = scmp.lt.s32.totalorder %s268, 255
      %s272 = scalar_select %p271, %s268, 255
      %s273 = smul.addr %s270, 256
      %s274 = sadd.s32 %s272, %s273
      %s275 = smul.addr %s274, 8
      %s276 = scalar_lea.vmem %s4, %s275
      %s277 = smul.u32 2, %s23
      %p278 = scmp.lt.s32.totalorder %s21, 1
      %s279 = scalar_select %p278, %s21, 1
      %p280 = scmp.lt.s32.totalorder %s277, 1
      %s281 = scalar_select %p280, %s277, 1
      %s282 = smul.addr %s279, 32
      %s283 = sadd.s32 %s281, %s282
      %s284 = smul.addr %s283, 4
      %s285 = scalar_lea.vmem %s0, %s284
      %s286 = smul.u32 2, %s23
      %s287 = smul.u32 32, %s22
      %p288 = scmp.lt.s32.totalorder %s287, 255
      %s289 = scalar_select %p288, %s287, 255
      %s290 = smul.addr %s289, 4
      %s291 = scalar_lea.vmem %s1, %s290
      %s292 = smul.u32 32, %s22
      %s293 = smul.u32 32, %s22
      %p294 = scmp.lt.s32.totalorder %s293, 255
      %s295 = scalar_select %p294, %s293, 255
      %s296 = smul.addr %s295, 8
      %s297 = scalar_lea.vmem %s2, %s296
      %s298 = smul.u32 32, %s22
      %s299 = smul.u32 32, %s22
      %s300 = smul.u32 2, %s23
      %p301 = scmp.lt.s32.totalorder %s21, 1
      %s302 = scalar_select %p301, %s21, 1
      %p303 = scmp.lt.s32.totalorder %s299, 255
      %s304 = scalar_select %p303, %s299, 255
      %p305 = scmp.lt.s32.totalorder %s300, 1
      %s306 = scalar_select %p305, %s300, 1
      %s307 = smul.addr %s304, 2
      %s308 = sadd.s32 %s306, %s307
      %s309 = smul.addr %s302, 512
      %s310 = sadd.s32 %s308, %s309
      %s311 = smul.addr %s310, 4
      %s312 = scalar_lea.vmem %s3, %s311
      %s313 = smul.u32 32, %s22
      %s314 = smul.u32 2, %s23
      %s315 = smul.u32 32, %s22
      %p316 = scmp.lt.s32.totalorder %s21, 1
      %s317 = scalar_select %p316, %s21, 1
      %p318 = scmp.lt.s32.totalorder %s315, 255
      %s319 = scalar_select %p318, %s315, 255
      %s320 = smul.addr %s317, 256
      %s321 = sadd.s32 %s319, %s320
      %s322 = smul.addr %s321, 8
      %s323 = scalar_lea.vmem %s4, %s322
      %s324 = smul.u32 32, %s22
      %p326 = scmp.eq.s32.totalorder %s23, 0
      // Predicated region
      $region33: #{netc_forward.2} parent=31 // pred_check
        %p327 = pneg %p326
      $region34: #{netc_forward.2} parent=31 // pred_check_branch
        %329 = sbr.rel (%p327) target = $region36
      $region35: #{netc_forward.2} parent=31 // pred_region
        %vm330 = vcmask 7168
        %331 = vst.msk [vmem:[%s323] sm:$0xff] %vm330, 0.0
        %332 = vst.msk [vmem:[%s323 + $0x8] sm:$0xff] %vm330, 0.0
        %333 = vst.msk [vmem:[%s323 + $0x10] sm:$0xff] %vm330, 0.0
        %334 = vst.msk [vmem:[%s323 + $0x18] sm:$0xff] %vm330, 0.0
        %335 = vst.msk [vmem:[%s323 + $0x20] sm:$0xff] %vm330, 0.0
        %336 = vst.msk [vmem:[%s323 + $0x28] sm:$0xff] %vm330, 0.0
        %337 = vst.msk [vmem:[%s323 + $0x30] sm:$0xff] %vm330, 0.0
        %338 = vst.msk [vmem:[%s323 + $0x38] sm:$0xff] %vm330, 0.0
        %339 = vst.msk [vmem:[%s323 + $0x40] sm:$0xff] %vm330, 0.0
        %340 = vst.msk [vmem:[%s323 + $0x48] sm:$0xff] %vm330, 0.0
        %341 = vst.msk [vmem:[%s323 + $0x50] sm:$0xff] %vm330, 0.0
        %342 = vst.msk [vmem:[%s323 + $0x58] sm:$0xff] %vm330, 0.0
        %343 = vst.msk [vmem:[%s323 + $0x60] sm:$0xff] %vm330, 0.0
        %344 = vst.msk [vmem:[%s323 + $0x68] sm:$0xff] %vm330, 0.0
        %345 = vst.msk [vmem:[%s323 + $0x70] sm:$0xff] %vm330, 0.0
        %346 = vst.msk [vmem:[%s323 + $0x78] sm:$0xff] %vm330, 0.0
        %347 = vst.msk [vmem:[%s323 + $0x80] sm:$0xff] %vm330, 0.0
        %348 = vst.msk [vmem:[%s323 + $0x88] sm:$0xff] %vm330, 0.0
        %349 = vst.msk [vmem:[%s323 + $0x90] sm:$0xff] %vm330, 0.0
        %350 = vst.msk [vmem:[%s323 + $0x98] sm:$0xff] %vm330, 0.0
        %351 = vst.msk [vmem:[%s323 + $0xa0] sm:$0xff] %vm330, 0.0
        %352 = vst.msk [vmem:[%s323 + $0xa8] sm:$0xff] %vm330, 0.0
        %353 = vst.msk [vmem:[%s323 + $0xb0] sm:$0xff] %vm330, 0.0
        %354 = vst.msk [vmem:[%s323 + $0xb8] sm:$0xff] %vm330, 0.0
        %355 = vst.msk [vmem:[%s323 + $0xc0] sm:$0xff] %vm330, 0.0
        %356 = vst.msk [vmem:[%s323 + $0xc8] sm:$0xff] %vm330, 0.0
        %357 = vst.msk [vmem:[%s323 + $0xd0] sm:$0xff] %vm330, 0.0
        %358 = vst.msk [vmem:[%s323 + $0xd8] sm:$0xff] %vm330, 0.0
        %359 = vst.msk [vmem:[%s323 + $0xe0] sm:$0xff] %vm330, 0.0
        %360 = vst.msk [vmem:[%s323 + $0xe8] sm:$0xff] %vm330, 0.0
        %361 = vst.msk [vmem:[%s323 + $0xf0] sm:$0xff] %vm330, 0.0
        %362 = vst.msk [vmem:[%s323 + $0xf8] sm:$0xff] %vm330, 0.0
      $region36: #{netc_forward.2} parent=31 // pred_fallthru
        _
      %v363 = vld [vmem:[%s291] sm:$0xf]
      %v364 = vld [vmem:[%s291 + $0x4] sm:$0xf]
      %v365 = vld [vmem:[%s291 + $0x8] sm:$0xf]
      %v366 = vld [vmem:[%s291 + $0xc] sm:$0xf]
      %v367 = vld [vmem:[%s291 + $0x10] sm:$0xf]
      %v368 = vld [vmem:[%s291 + $0x14] sm:$0xf]
      %v369 = vld [vmem:[%s291 + $0x18] sm:$0xf]
      %v370 = vld [vmem:[%s291 + $0x1c] sm:$0xf]
      %v371 = vld [vmem:[%s291 + $0x20] sm:$0xf]
      %v372 = vld [vmem:[%s291 + $0x24] sm:$0xf]
      %v373 = vld [vmem:[%s291 + $0x28] sm:$0xf]
      %v374 = vld [vmem:[%s291 + $0x2c] sm:$0xf]
      %v375 = vld [vmem:[%s291 + $0x30] sm:$0xf]
      %v376 = vld [vmem:[%s291 + $0x34] sm:$0xf]
      %v377 = vld [vmem:[%s291 + $0x38] sm:$0xf]
      %v378 = vld [vmem:[%s291 + $0x3c] sm:$0xf]
      %v379 = vld [vmem:[%s285] sm:$0xff]
      %v380 = vld [vmem:[%s285 + $0x8] sm:$0xff]
      %v381 = vld [vmem:[%s285 + $0x10] sm:$0xff]
      %v382 = vld [vmem:[%s285 + $0x18] sm:$0xff]
      %v383 = vld [vmem:[%s285 + $0x20] sm:$0xff]
      %v384 = vld [vmem:[%s285 + $0x28] sm:$0xff]
      %v385 = vld [vmem:[%s285 + $0x30] sm:$0xff]
      %v386 = vld [vmem:[%s285 + $0x38] sm:$0xff]
      %v387 = vld [vmem:[%s285 + $0x40] sm:$0xff]
      %v388 = vld [vmem:[%s285 + $0x48] sm:$0xff]
      %v389 = vld [vmem:[%s285 + $0x50] sm:$0xff]
      %v390 = vld [vmem:[%s285 + $0x58] sm:$0xff]
      %v391 = vld [vmem:[%s285 + $0x60] sm:$0xff]
      %v392 = vld [vmem:[%s285 + $0x68] sm:$0xff]
      %v393 = vld [vmem:[%s285 + $0x70] sm:$0xff]
      %v394 = vld [vmem:[%s285 + $0x78] sm:$0xff]
      %v395 = vld [vmem:[%s297] sm:$0xff]
      %v396 = vld [vmem:[%s297 + $0x8] sm:$0xff]
      %v397 = vld [vmem:[%s297 + $0x10] sm:$0xff]
      %v398 = vld [vmem:[%s297 + $0x18] sm:$0xff]
      %v399 = vld [vmem:[%s297 + $0x20] sm:$0xff]
      %v400 = vld [vmem:[%s297 + $0x28] sm:$0xff]
      %v401 = vld [vmem:[%s297 + $0x30] sm:$0xff]
      %v402 = vld [vmem:[%s297 + $0x38] sm:$0xff]
      %v403 = vld [vmem:[%s297 + $0x40] sm:$0xff]
      %v404 = vld [vmem:[%s297 + $0x48] sm:$0xff]
      %v405 = vld [vmem:[%s297 + $0x50] sm:$0xff]
      %v406 = vld [vmem:[%s297 + $0x58] sm:$0xff]
      %v407 = vld [vmem:[%s297 + $0x60] sm:$0xff]
      %v408 = vld [vmem:[%s297 + $0x68] sm:$0xff]
      %v409 = vld [vmem:[%s297 + $0x70] sm:$0xff]
      %v410 = vld [vmem:[%s297 + $0x78] sm:$0xff]
      %412 = vset.pattern.permute.xlu0 0
      %413 = vperm.xlu0 %412, %v395
      %v414 = vpop.permute.xlu0 %413
      %417 = vset.pattern.permute.xlu0 0
      %418 = vperm.xlu0 %417, %v396
      %v419 = vpop.permute.xlu0 %418
      %422 = vset.pattern.permute.xlu0 0
      %423 = vperm.xlu0 %422, %v397
      %v424 = vpop.permute.xlu0 %423
      %427 = vset.pattern.permute.xlu0 0
      %428 = vperm.xlu0 %427, %v398
      %v429 = vpop.permute.xlu0 %428
      %432 = vset.pattern.permute.xlu0 0
      %433 = vperm.xlu0 %432, %v399
      %v434 = vpop.permute.xlu0 %433
      %437 = vset.pattern.permute.xlu0 0
      %438 = vperm.xlu0 %437, %v400
      %v439 = vpop.permute.xlu0 %438
      %442 = vset.pattern.permute.xlu0 0
      %443 = vperm.xlu0 %442, %v401
      %v444 = vpop.permute.xlu0 %443
      %447 = vset.pattern.permute.xlu0 0
      %448 = vperm.xlu0 %447, %v402
      %v449 = vpop.permute.xlu0 %448
      %452 = vset.pattern.permute.xlu0 0
      %453 = vperm.xlu0 %452, %v403
      %v454 = vpop.permute.xlu0 %453
      %457 = vset.pattern.permute.xlu0 0
      %458 = vperm.xlu0 %457, %v404
      %v459 = vpop.permute.xlu0 %458
      %462 = vset.pattern.permute.xlu0 0
      %463 = vperm.xlu0 %462, %v405
      %v464 = vpop.permute.xlu0 %463
      %467 = vset.pattern.permute.xlu0 0
      %468 = vperm.xlu0 %467, %v406
      %v469 = vpop.permute.xlu0 %468
      %472 = vset.pattern.permute.xlu0 0
      %473 = vperm.xlu0 %472, %v407
      %v474 = vpop.permute.xlu0 %473
      %477 = vset.pattern.permute.xlu0 0
      %478 = vperm.xlu0 %477, %v408
      %v479 = vpop.permute.xlu0 %478
      %482 = vset.pattern.permute.xlu0 0
      %483 = vperm.xlu0 %482, %v409
      %v484 = vpop.permute.xlu0 %483
      %487 = vset.pattern.permute.xlu0 0
      %488 = vperm.xlu0 %487, %v410
      %v489 = vpop.permute.xlu0 %488
      %v507 = vunpack.c.l.b16 %v363
      %v508 = vunpack.c.l.b16 %v364
      %v509 = vunpack.c.l.b16 %v365
      %v510 = vunpack.c.l.b16 %v366
      %v511 = vunpack.c.l.b16 %v367
      %v512 = vunpack.c.l.b16 %v368
      %v513 = vunpack.c.l.b16 %v369
      %v514 = vunpack.c.l.b16 %v370
      %v515 = vunpack.c.l.b16 %v371
      %v516 = vunpack.c.l.b16 %v372
      %v517 = vunpack.c.l.b16 %v373
      %v518 = vunpack.c.l.b16 %v374
      %v519 = vunpack.c.l.b16 %v375
      %v520 = vunpack.c.l.b16 %v376
      %v521 = vunpack.c.l.b16 %v377
      %v522 = vunpack.c.l.b16 %v378
      %v523 = vpack.c.b16 %v508, %v507
      %v524 = vpack.c.b16 %v510, %v509
      %v525 = vpack.c.b16 %v512, %v511
      %v526 = vpack.c.b16 %v514, %v513
      %v527 = vpack.c.b16 %v516, %v515
      %v528 = vpack.c.b16 %v518, %v517
      %v529 = vpack.c.b16 %v520, %v519
      %v530 = vpack.c.b16 %v522, %v521
      %v555 = vunpack.c.l.b16 %v379
      %v556 = vunpack.c.h.b16 %v379
      %v557 = vunpack.c.l.b16 %v380
      %v558 = vunpack.c.h.b16 %v380
      %v559 = vunpack.c.l.b16 %v381
      %v560 = vunpack.c.h.b16 %v381
      %v561 = vunpack.c.l.b16 %v382
      %v562 = vunpack.c.h.b16 %v382
      %v563 = vunpack.c.l.b16 %v383
      %v564 = vunpack.c.h.b16 %v383
      %v565 = vunpack.c.l.b16 %v384
      %v566 = vunpack.c.h.b16 %v384
      %v567 = vunpack.c.l.b16 %v385
      %v568 = vunpack.c.h.b16 %v385
      %v569 = vunpack.c.l.b16 %v386
      %v570 = vunpack.c.h.b16 %v386
      %v571 = vunpack.c.l.b16 %v387
      %v572 = vunpack.c.h.b16 %v387
      %v573 = vunpack.c.l.b16 %v388
      %v574 = vunpack.c.h.b16 %v388
      %v575 = vunpack.c.l.b16 %v389
      %v576 = vunpack.c.h.b16 %v389
      %v577 = vunpack.c.l.b16 %v390
      %v578 = vunpack.c.h.b16 %v390
      %v579 = vunpack.c.l.b16 %v391
      %v580 = vunpack.c.h.b16 %v391
      %v581 = vunpack.c.l.b16 %v392
      %v582 = vunpack.c.h.b16 %v392
      %v583 = vunpack.c.l.b16 %v393
      %v584 = vunpack.c.h.b16 %v393
      %v585 = vunpack.c.l.b16 %v394
      %v586 = vunpack.c.h.b16 %v394
      %v587 = vpack.c.b16 %v557, %v555
      %v588 = vpack.c.b16 %v558, %v556
      %v589 = vpack.c.b16 %v561, %v559
      %v590 = vpack.c.b16 %v562, %v560
      %v591 = vpack.c.b16 %v565, %v563
      %v592 = vpack.c.b16 %v566, %v564
      %v593 = vpack.c.b16 %v569, %v567
      %v594 = vpack.c.b16 %v570, %v568
      %v595 = vpack.c.b16 %v573, %v571
      %v596 = vpack.c.b16 %v574, %v572
      %v597 = vpack.c.b16 %v577, %v575
      %v598 = vpack.c.b16 %v578, %v576
      %v599 = vpack.c.b16 %v581, %v579
      %v600 = vpack.c.b16 %v582, %v580
      %v601 = vpack.c.b16 %v585, %v583
      %v602 = vpack.c.b16 %v586, %v584
      %619 = vmatprep.subr.bf16.mxu0 %v602
      %620 = vmatpush1.bf16.msra.mxu0 %v601
      %621 = vmatprep.subr.bf16.mxu0 %v600
      %622 = vmatpush1.bf16.msra.mxu0 %v599
      %623 = vmatprep.subr.bf16.mxu0 %v598
      %624 = vmatpush1.bf16.msra.mxu0 %v597
      %625 = vmatprep.subr.bf16.mxu0 %v596
      %626 = vmatpush1.bf16.msra.mxu0 %v595
      %627 = vmatprep.subr.bf16.mxu0 %v594
      %628 = vmatpush1.bf16.msra.mxu0 %v593
      %629 = vmatprep.subr.bf16.mxu0 %v592
      %630 = vmatpush1.bf16.msra.mxu0 %v591
      %631 = vmatprep.subr.bf16.mxu0 %v590
      %632 = vmatpush1.bf16.msra.mxu0 %v589
      %633 = vmatprep.subr.bf16.mxu0 %v588
      %634 = vmatpush1.bf16.msra.mxu0 %v587
      %635 = vmatprep.subr.bf16.mxu0 0
      %636 = vmatpush2.bf16.msra.mxu0 0
      %637 = vmatprep.subr.bf16.mxu0 0
      %638 = vmatpush2.bf16.msra.mxu0 0
      %639 = vmatprep.subr.bf16.mxu0 0
      %640 = vmatpush2.bf16.msra.mxu0 0
      %641 = vmatprep.subr.bf16.mxu0 0
      %642 = vmatpush2.bf16.msra.mxu0 0
      %643 = vmatprep.subr.bf16.mxu0 0
      %644 = vmatpush2.bf16.msra.mxu0 0
      %645 = vmatprep.subr.bf16.mxu0 0
      %646 = vmatpush2.bf16.msra.mxu0 0
      %647 = vmatprep.subr.bf16.mxu0 0
      %648 = vmatpush2.bf16.msra.mxu0 0
      %649 = vmatprep.subr.bf16.mxu0 0
      %650 = vmatpush2.bf16.msra.mxu0 0
      %651 = vmatprep.mubr.bf16.mxu0 0
      %652 = vmatmul.mubr.bf16.gmra.mxu0 %v523
      %v653 = vpop.f32.mrf.mxu0
      %v654 = vadd.f32 %v414, %v653
      %v655 = vpop.f32.mrf.mxu0
      %v656 = vadd.f32 %v414, %v655
      %v657 = vpop.f32.mrf.mxu0
      %v658 = vadd.f32 %v419, %v657
      %v659 = vpop.f32.mrf.mxu0
      %v660 = vadd.f32 %v419, %v659
      %661 = vmatprep.mubr.bf16.mxu0 0
      %662 = vmatmul.mubr.bf16.gmra.mxu0 %v524
      %v663 = vpop.f32.mrf.mxu0
      %v664 = vadd.f32 %v424, %v663
      %v665 = vpop.f32.mrf.mxu0
      %v666 = vadd.f32 %v424, %v665
      %v667 = vpop.f32.mrf.mxu0
      %v668 = vadd.f32 %v429, %v667
      %v669 = vpop.f32.mrf.mxu0
      %v670 = vadd.f32 %v429, %v669
      %671 = vmatprep.mubr.bf16.mxu0 0
      %672 = vmatmul.mubr.bf16.gmra.mxu0 %v525
      %v673 = vpop.f32.mrf.mxu0
      %v674 = vadd.f32 %v434, %v673
      %v675 = vpop.f32.mrf.mxu0
      %v676 = vadd.f32 %v434, %v675
      %v677 = vpop.f32.mrf.mxu0
      %v678 = vadd.f32 %v439, %v677
      %v679 = vpop.f32.mrf.mxu0
      %v680 = vadd.f32 %v439, %v679
      %681 = vmatprep.mubr.bf16.mxu0 0
      %682 = vmatmul.mubr.bf16.gmra.mxu0 %v526
      %v683 = vpop.f32.mrf.mxu0
      %v684 = vadd.f32 %v444, %v683
      %v685 = vpop.f32.mrf.mxu0
      %v686 = vadd.f32 %v444, %v685
      %v687 = vpop.f32.mrf.mxu0
      %v688 = vadd.f32 %v449, %v687
      %v689 = vpop.f32.mrf.mxu0
      %v690 = vadd.f32 %v449, %v689
      %691 = vmatprep.mubr.bf16.mxu0 0
      %692 = vmatmul.mubr.bf16.gmra.mxu0 %v527
      %v693 = vpop.f32.mrf.mxu0
      %v694 = vadd.f32 %v454, %v693
      %v695 = vpop.f32.mrf.mxu0
      %v696 = vadd.f32 %v454, %v695
      %v697 = vpop.f32.mrf.mxu0
      %v698 = vadd.f32 %v459, %v697
      %v699 = vpop.f32.mrf.mxu0
      %v700 = vadd.f32 %v459, %v699
      %701 = vmatprep.mubr.bf16.mxu0 0
      %702 = vmatmul.mubr.bf16.gmra.mxu0 %v528
      %v703 = vpop.f32.mrf.mxu0
      %v704 = vadd.f32 %v464, %v703
      %v705 = vpop.f32.mrf.mxu0
      %v706 = vadd.f32 %v464, %v705
      %v707 = vpop.f32.mrf.mxu0
      %v708 = vadd.f32 %v469, %v707
      %v709 = vpop.f32.mrf.mxu0
      %v710 = vadd.f32 %v469, %v709
      %711 = vmatprep.mubr.bf16.mxu0 0
      %712 = vmatmul.mubr.bf16.gmra.mxu0 %v529
      %v713 = vpop.f32.mrf.mxu0
      %v714 = vadd.f32 %v474, %v713
      %v715 = vpop.f32.mrf.mxu0
      %v716 = vadd.f32 %v474, %v715
      %v717 = vpop.f32.mrf.mxu0
      %v718 = vadd.f32 %v479, %v717
      %v719 = vpop.f32.mrf.mxu0
      %v720 = vadd.f32 %v479, %v719
      %721 = vmatprep.mubr.bf16.mxu0 0
      %722 = vmatmul.mubr.bf16.gmra.mxu0 %v530
      %v723 = vpop.f32.mrf.mxu0
      %v724 = vadd.f32 %v484, %v723
      %v725 = vpop.f32.mrf.mxu0
      %v726 = vadd.f32 %v484, %v725
      %v727 = vpop.f32.mrf.mxu0
      %v728 = vadd.f32 %v489, %v727
      %v729 = vpop.f32.mrf.mxu0
      %v730 = vadd.f32 %v489, %v729
      %731 = vdwg.mxu0
      %v732 = vpack.c.bf16 %v658, %v654
      %v733 = vpack.c.bf16 %v660, %v656
      %v734 = vpack.c.bf16 %v668, %v664
      %v735 = vpack.c.bf16 %v670, %v666
      %v736 = vpack.c.bf16 %v678, %v674
      %v737 = vpack.c.bf16 %v680, %v676
      %v738 = vpack.c.bf16 %v688, %v684
      %v739 = vpack.c.bf16 %v690, %v686
      %v740 = vpack.c.bf16 %v698, %v694
      %v741 = vpack.c.bf16 %v700, %v696
      %v742 = vpack.c.bf16 %v708, %v704
      %v743 = vpack.c.bf16 %v710, %v706
      %v744 = vpack.c.bf16 %v718, %v714
      %v745 = vpack.c.bf16 %v720, %v716
      %v746 = vpack.c.bf16 %v728, %v724
      %v747 = vpack.c.bf16 %v730, %v726
      %v764 = vunpack.c.l.b16 %v732
      %v765 = vunpack.c.l.b16 %v733
      %v766 = vunpack.c.h.b16 %v732
      %v767 = vunpack.c.h.b16 %v733
      %v768 = vunpack.c.l.b16 %v734
      %v769 = vunpack.c.l.b16 %v735
      %v770 = vunpack.c.h.b16 %v734
      %v771 = vunpack.c.h.b16 %v735
      %v772 = vunpack.c.l.b16 %v736
      %v773 = vunpack.c.l.b16 %v737
      %v774 = vunpack.c.h.b16 %v736
      %v775 = vunpack.c.h.b16 %v737
      %v776 = vunpack.c.l.b16 %v738
      %v777 = vunpack.c.l.b16 %v739
      %v778 = vunpack.c.h.b16 %v738
      %v779 = vunpack.c.h.b16 %v739
      %v780 = vunpack.c.l.b16 %v740
      %v781 = vunpack.c.l.b16 %v741
      %v782 = vunpack.c.h.b16 %v740
      %v783 = vunpack.c.h.b16 %v741
      %v784 = vunpack.c.l.b16 %v742
      %v785 = vunpack.c.l.b16 %v743
      %v786 = vunpack.c.h.b16 %v742
      %v787 = vunpack.c.h.b16 %v743
      %v788 = vunpack.c.l.b16 %v744
      %v789 = vunpack.c.l.b16 %v745
      %v790 = vunpack.c.h.b16 %v744
      %v791 = vunpack.c.h.b16 %v745
      %v792 = vunpack.c.l.b16 %v746
      %v793 = vunpack.c.l.b16 %v747
      %v794 = vunpack.c.h.b16 %v746
      %v795 = vunpack.c.h.b16 %v747
      %v796 = vpack.c.b16 %v765, %v764
      %v797 = vpack.c.b16 %v767, %v766
      %v798 = vpack.c.b16 %v769, %v768
      %v799 = vpack.c.b16 %v771, %v770
      %v800 = vpack.c.b16 %v773, %v772
      %v801 = vpack.c.b16 %v775, %v774
      %v802 = vpack.c.b16 %v777, %v776
      %v803 = vpack.c.b16 %v779, %v778
      %v804 = vpack.c.b16 %v781, %v780
      %v805 = vpack.c.b16 %v783, %v782
      %v806 = vpack.c.b16 %v785, %v784
      %v807 = vpack.c.b16 %v787, %v786
      %v808 = vpack.c.b16 %v789, %v788
      %v809 = vpack.c.b16 %v791, %v790
      %v810 = vpack.c.b16 %v793, %v792
      %v811 = vpack.c.b16 %v795, %v794
      %s828 = smul.u32 0, 2
      %s829 = smul.addr %s828, 4
      %s830 = scalar_lea.vmem %s312, %s829
      %831 = vst [vmem:[%s830] sm:$0xff] %v796
      %832 = vst [vmem:[%s830 + $0x8] sm:$0xff] %v797
      %833 = vst [vmem:[%s830 + $0x10] sm:$0xff] %v798
      %834 = vst [vmem:[%s830 + $0x18] sm:$0xff] %v799
      %835 = vst [vmem:[%s830 + $0x20] sm:$0xff] %v800
      %836 = vst [vmem:[%s830 + $0x28] sm:$0xff] %v801
      %837 = vst [vmem:[%s830 + $0x30] sm:$0xff] %v802
      %838 = vst [vmem:[%s830 + $0x38] sm:$0xff] %v803
      %839 = vst [vmem:[%s830 + $0x40] sm:$0xff] %v804
      %840 = vst [vmem:[%s830 + $0x48] sm:$0xff] %v805
      %841 = vst [vmem:[%s830 + $0x50] sm:$0xff] %v806
      %842 = vst [vmem:[%s830 + $0x58] sm:$0xff] %v807
      %843 = vst [vmem:[%s830 + $0x60] sm:$0xff] %v808
      %844 = vst [vmem:[%s830 + $0x68] sm:$0xff] %v809
      %845 = vst [vmem:[%s830 + $0x70] sm:$0xff] %v810
      %846 = vst [vmem:[%s830 + $0x78] sm:$0xff] %v811
      %v847 = vld [vmem:[%s323] sm:$0xff]
      %v848 = vld [vmem:[%s323 + $0x8] sm:$0xff]
      %v849 = vld [vmem:[%s323 + $0x10] sm:$0xff]
      %v850 = vld [vmem:[%s323 + $0x18] sm:$0xff]
      %v851 = vld [vmem:[%s323 + $0x20] sm:$0xff]
      %v852 = vld [vmem:[%s323 + $0x28] sm:$0xff]
      %v853 = vld [vmem:[%s323 + $0x30] sm:$0xff]
      %v854 = vld [vmem:[%s323 + $0x38] sm:$0xff]
      %v855 = vld [vmem:[%s323 + $0x40] sm:$0xff]
      %v856 = vld [vmem:[%s323 + $0x48] sm:$0xff]
      %v857 = vld [vmem:[%s323 + $0x50] sm:$0xff]
      %v858 = vld [vmem:[%s323 + $0x58] sm:$0xff]
      %v859 = vld [vmem:[%s323 + $0x60] sm:$0xff]
      %v860 = vld [vmem:[%s323 + $0x68] sm:$0xff]
      %v861 = vld [vmem:[%s323 + $0x70] sm:$0xff]
      %v862 = vld [vmem:[%s323 + $0x78] sm:$0xff]
      %v863 = vadd.f32 %v654, %v656
      %864 = vadd.xlane.f32.xlu0 %v863
      %v865 = vpop.xlane.xlu0 %864
      %v866 = vadd.f32 %v658, %v660
      %867 = vadd.xlane.f32.xlu0 %v866
      %v868 = vpop.xlane.xlu0 %867
      %v869 = vadd.f32 %v664, %v666
      %870 = vadd.xlane.f32.xlu0 %v869
      %v871 = vpop.xlane.xlu0 %870
      %v872 = vadd.f32 %v668, %v670
      %873 = vadd.xlane.f32.xlu0 %v872
      %v874 = vpop.xlane.xlu0 %873
      %v875 = vadd.f32 %v674, %v676
      %876 = vadd.xlane.f32.xlu0 %v875
      %v877 = vpop.xlane.xlu0 %876
      %v878 = vadd.f32 %v678, %v680
      %879 = vadd.xlane.f32.xlu0 %v878
      %v880 = vpop.xlane.xlu0 %879
      %v881 = vadd.f32 %v684, %v686
      %882 = vadd.xlane.f32.xlu0 %v881
      %v883 = vpop.xlane.xlu0 %882
      %v884 = vadd.f32 %v688, %v690
      %885 = vadd.xlane.f32.xlu0 %v884
      %v886 = vpop.xlane.xlu0 %885
      %v887 = vadd.f32 %v694, %v696
      %888 = vadd.xlane.f32.xlu0 %v887
      %v889 = vpop.xlane.xlu0 %888
      %v890 = vadd.f32 %v698, %v700
      %891 = vadd.xlane.f32.xlu0 %v890
      %v892 = vpop.xlane.xlu0 %891
      %v893 = vadd.f32 %v704, %v706
      %894 = vadd.xlane.f32.xlu0 %v893
      %v895 = vpop.xlane.xlu0 %894
      %v896 = vadd.f32 %v708, %v710
      %897 = vadd.xlane.f32.xlu0 %v896
      %v898 = vpop.xlane.xlu0 %897
      %v899 = vadd.f32 %v714, %v716
      %900 = vadd.xlane.f32.xlu0 %v899
      %v901 = vpop.xlane.xlu0 %900
      %v902 = vadd.f32 %v718, %v720
      %903 = vadd.xlane.f32.xlu0 %v902
      %v904 = vpop.xlane.xlu0 %903
      %v905 = vadd.f32 %v724, %v726
      %906 = vadd.xlane.f32.xlu0 %v905
      %v907 = vpop.xlane.xlu0 %906
      %v908 = vadd.f32 %v728, %v730
      %909 = vadd.xlane.f32.xlu0 %v908
      %v910 = vpop.xlane.xlu0 %909
      %v911 = vadd.f32 %v847, %v865
      %v912 = vadd.f32 %v848, %v868
      %v913 = vadd.f32 %v849, %v871
      %v914 = vadd.f32 %v850, %v874
      %v915 = vadd.f32 %v851, %v877
      %v916 = vadd.f32 %v852, %v880
      %v917 = vadd.f32 %v853, %v883
      %v918 = vadd.f32 %v854, %v886
      %v919 = vadd.f32 %v855, %v889
      %v920 = vadd.f32 %v856, %v892
      %v921 = vadd.f32 %v857, %v895
      %v922 = vadd.f32 %v858, %v898
      %v923 = vadd.f32 %v859, %v901
      %v924 = vadd.f32 %v860, %v904
      %v925 = vadd.f32 %v861, %v907
      %v926 = vadd.f32 %v862, %v910
      %vm927 = vcmask 7168
      %928 = vst.msk [vmem:[%s323] sm:$0xff] %vm927, %v911
      %929 = vst.msk [vmem:[%s323 + $0x8] sm:$0xff] %vm927, %v912
      %930 = vst.msk [vmem:[%s323 + $0x10] sm:$0xff] %vm927, %v913
      %931 = vst.msk [vmem:[%s323 + $0x18] sm:$0xff] %vm927, %v914
      %932 = vst.msk [vmem:[%s323 + $0x20] sm:$0xff] %vm927, %v915
      %933 = vst.msk [vmem:[%s323 + $0x28] sm:$0xff] %vm927, %v916
      %934 = vst.msk [vmem:[%s323 + $0x30] sm:$0xff] %vm927, %v917
      %935 = vst.msk [vmem:[%s323 + $0x38] sm:$0xff] %vm927, %v918
      %936 = vst.msk [vmem:[%s323 + $0x40] sm:$0xff] %vm927, %v919
      %937 = vst.msk [vmem:[%s323 + $0x48] sm:$0xff] %vm927, %v920
      %938 = vst.msk [vmem:[%s323 + $0x50] sm:$0xff] %vm927, %v921
      %939 = vst.msk [vmem:[%s323 + $0x58] sm:$0xff] %vm927, %v922
      %940 = vst.msk [vmem:[%s323 + $0x60] sm:$0xff] %vm927, %v923
      %941 = vst.msk [vmem:[%s323 + $0x68] sm:$0xff] %vm927, %v924
      %942 = vst.msk [vmem:[%s323 + $0x70] sm:$0xff] %vm927, %v925
      %943 = vst.msk [vmem:[%s323 + $0x78] sm:$0xff] %vm927, %v926
      %s944 = scalar_lea.vmem %s291, 64
      %v945 = vld [vmem:[%s944] sm:$0xf]
      %v946 = vld [vmem:[%s944 + $0x4] sm:$0xf]
      %v947 = vld [vmem:[%s944 + $0x8] sm:$0xf]
      %v948 = vld [vmem:[%s944 + $0xc] sm:$0xf]
      %v949 = vld [vmem:[%s944 + $0x10] sm:$0xf]
      %v950 = vld [vmem:[%s944 + $0x14] sm:$0xf]
      %v951 = vld [vmem:[%s944 + $0x18] sm:$0xf]
      %v952 = vld [vmem:[%s944 + $0x1c] sm:$0xf]
      %v953 = vld [vmem:[%s944 + $0x20] sm:$0xf]
      %v954 = vld [vmem:[%s944 + $0x24] sm:$0xf]
      %v955 = vld [vmem:[%s944 + $0x28] sm:$0xf]
      %v956 = vld [vmem:[%s944 + $0x2c] sm:$0xf]
      %v957 = vld [vmem:[%s944 + $0x30] sm:$0xf]
      %v958 = vld [vmem:[%s944 + $0x34] sm:$0xf]
      %v959 = vld [vmem:[%s944 + $0x38] sm:$0xf]
      %v960 = vld [vmem:[%s944 + $0x3c] sm:$0xf]
      %v961 = vld [vmem:[%s285] sm:$0xff]
      %v962 = vld [vmem:[%s285 + $0x8] sm:$0xff]
      %v963 = vld [vmem:[%s285 + $0x10] sm:$0xff]
      %v964 = vld [vmem:[%s285 + $0x18] sm:$0xff]
      %v965 = vld [vmem:[%s285 + $0x20] sm:$0xff]
      %v966 = vld [vmem:[%s285 + $0x28] sm:$0xff]
      %v967 = vld [vmem:[%s285 + $0x30] sm:$0xff]
      %v968 = vld [vmem:[%s285 + $0x38] sm:$0xff]
      %v969 = vld [vmem:[%s285 + $0x40] sm:$0xff]
      %v970 = vld [vmem:[%s285 + $0x48] sm:$0xff]
      %v971 = vld [vmem:[%s285 + $0x50] sm:$0xff]
      %v972 = vld [vmem:[%s285 + $0x58] sm:$0xff]
      %v973 = vld [vmem:[%s285 + $0x60] sm:$0xff]
      %v974 = vld [vmem:[%s285 + $0x68] sm:$0xff]
      %v975 = vld [vmem:[%s285 + $0x70] sm:$0xff]
      %v976 = vld [vmem:[%s285 + $0x78] sm:$0xff]
      %s977 = scalar_lea.vmem %s297, 128
      %v978 = vld [vmem:[%s977] sm:$0xff]
      %v979 = vld [vmem:[%s977 + $0x8] sm:$0xff]
      %v980 = vld [vmem:[%s977 + $0x10] sm:$0xff]
      %v981 = vld [vmem:[%s977 + $0x18] sm:$0xff]
      %v982 = vld [vmem:[%s977 + $0x20] sm:$0xff]
      %v983 = vld [vmem:[%s977 + $0x28] sm:$0xff]
      %v984 = vld [vmem:[%s977 + $0x30] sm:$0xff]
      %v985 = vld [vmem:[%s977 + $0x38] sm:$0xff]
      %v986 = vld [vmem:[%s977 + $0x40] sm:$0xff]
      %v987 = vld [vmem:[%s977 + $0x48] sm:$0xff]
      %v988 = vld [vmem:[%s977 + $0x50] sm:$0xff]
      %v989 = vld [vmem:[%s977 + $0x58] sm:$0xff]
      %v990 = vld [vmem:[%s977 + $0x60] sm:$0xff]
      %v991 = vld [vmem:[%s977 + $0x68] sm:$0xff]
      %v992 = vld [vmem:[%s977 + $0x70] sm:$0xff]
      %v993 = vld [vmem:[%s977 + $0x78] sm:$0xff]
      %995 = vset.pattern.permute.xlu0 0
      %996 = vperm.xlu0 %995, %v978
      %v997 = vpop.permute.xlu0 %996
      %1000 = vset.pattern.permute.xlu0 0
      %1001 = vperm.xlu0 %1000, %v979
      %v1002 = vpop.permute.xlu0 %1001
      %1005 = vset.pattern.permute.xlu0 0
      %1006 = vperm.xlu0 %1005, %v980
      %v1007 = vpop.permute.xlu0 %1006
      %1010 = vset.pattern.permute.xlu0 0
      %1011 = vperm.xlu0 %1010, %v981
      %v1012 = vpop.permute.xlu0 %1011
      %1015 = vset.pattern.permute.xlu0 0
      %1016 = vperm.xlu0 %1015, %v982
      %v1017 = vpop.permute.xlu0 %1016
      %1020 = vset.pattern.permute.xlu0 0
      %1021 = vperm.xlu0 %1020, %v983
      %v1022 = vpop.permute.xlu0 %1021
      %1025 = vset.pattern.permute.xlu0 0
      %1026 = vperm.xlu0 %1025, %v984
      %v1027 = vpop.permute.xlu0 %1026
      %1030 = vset.pattern.permute.xlu0 0
      %1031 = vperm.xlu0 %1030, %v985
      %v1032 = vpop.permute.xlu0 %1031
      %1035 = vset.pattern.permute.xlu0 0
      %1036 = vperm.xlu0 %1035, %v986
      %v1037 = vpop.permute.xlu0 %1036
      %1040 = vset.pattern.permute.xlu0 0
      %1041 = vperm.xlu0 %1040, %v987
      %v1042 = vpop.permute.xlu0 %1041
      %1045 = vset.pattern.permute.xlu0 0
      %1046 = vperm.xlu0 %1045, %v988
      %v1047 = vpop.permute.xlu0 %1046
      %1050 = vset.pattern.permute.xlu0 0
      %1051 = vperm.xlu0 %1050, %v989
      %v1052 = vpop.permute.xlu0 %1051
      %1055 = vset.pattern.permute.xlu0 0
      %1056 = vperm.xlu0 %1055, %v990
      %v1057 = vpop.permute.xlu0 %1056
      %1060 = vset.pattern.permute.xlu0 0
      %1061 = vperm.xlu0 %1060, %v991
      %v1062 = vpop.permute.xlu0 %1061
      %1065 = vset.pattern.permute.xlu0 0
      %1066 = vperm.xlu0 %1065, %v992
      %v1067 = vpop.permute.xlu0 %1066
      %1070 = vset.pattern.permute.xlu0 0
      %1071 = vperm.xlu0 %1070, %v993
      %v1072 = vpop.permute.xlu0 %1071
      %v1090 = vunpack.c.l.b16 %v945
      %v1091 = vunpack.c.l.b16 %v946
      %v1092 = vunpack.c.l.b16 %v947
      %v1093 = vunpack.c.l.b16 %v948
      %v1094 = vunpack.c.l.b16 %v949
      %v1095 = vunpack.c.l.b16 %v950
      %v1096 = vunpack.c.l.b16 %v951
      %v1097 = vunpack.c.l.b16 %v952
      %v1098 = vunpack.c.l.b16 %v953
      %v1099 = vunpack.c.l.b16 %v954
      %v1100 = vunpack.c.l.b16 %v955
      %v1101 = vunpack.c.l.b16 %v956
      %v1102 = vunpack.c.l.b16 %v957
      %v1103 = vunpack.c.l.b16 %v958
      %v1104 = vunpack.c.l.b16 %v959
      %v1105 = vunpack.c.l.b16 %v960
      %v1106 = vpack.c.b16 %v1091, %v1090
      %v1107 = vpack.c.b16 %v1093, %v1092
      %v1108 = vpack.c.b16 %v1095, %v1094
      %v1109 = vpack.c.b16 %v1097, %v1096
      %v1110 = vpack.c.b16 %v1099, %v1098
      %v1111 = vpack.c.b16 %v1101, %v1100
      %v1112 = vpack.c.b16 %v1103, %v1102
      %v1113 = vpack.c.b16 %v1105, %v1104
      %v1138 = vunpack.c.l.b16 %v961
      %v1139 = vunpack.c.h.b16 %v961
      %v1140 = vunpack.c.l.b16 %v962
      %v1141 = vunpack.c.h.b16 %v962
      %v1142 = vunpack.c.l.b16 %v963
      %v1143 = vunpack.c.h.b16 %v963
      %v1144 = vunpack.c.l.b16 %v964
      %v1145 = vunpack.c.h.b16 %v964
      %v1146 = vunpack.c.l.b16 %v965
      %v1147 = vunpack.c.h.b16 %v965
      %v1148 = vunpack.c.l.b16 %v966
      %v1149 = vunpack.c.h.b16 %v966
      %v1150 = vunpack.c.l.b16 %v967
      %v1151 = vunpack.c.h.b16 %v967
      %v1152 = vunpack.c.l.b16 %v968
      %v1153 = vunpack.c.h.b16 %v968
      %v1154 = vunpack.c.l.b16 %v969
      %v1155 = vunpack.c.h.b16 %v969
      %v1156 = vunpack.c.l.b16 %v970
      %v1157 = vunpack.c.h.b16 %v970
      %v1158 = vunpack.c.l.b16 %v971
      %v1159 = vunpack.c.h.b16 %v971
      %v1160 = vunpack.c.l.b16 %v972
      %v1161 = vunpack.c.h.b16 %v972
      %v1162 = vunpack.c.l.b16 %v973
      %v1163 = vunpack.c.h.b16 %v973
      %v1164 = vunpack.c.l.b16 %v974
      %v1165 = vunpack.c.h.b16 %v974
      %v1166 = vunpack.c.l.b16 %v975
      %v1167 = vunpack.c.h.b16 %v975
      %v1168 = vunpack.c.l.b16 %v976
      %v1169 = vunpack.c.h.b16 %v976
      %v1170 = vpack.c.b16 %v1140, %v1138
      %v1171 = vpack.c.b16 %v1141, %v1139
      %v1172 = vpack.c.b16 %v1144, %v1142
      %v1173 = vpack.c.b16 %v1145, %v1143
      %v1174 = vpack.c.b16 %v1148, %v1146
      %v1175 = vpack.c.b16 %v1149, %v1147
      %v1176 = vpack.c.b16 %v1152, %v1150
      %v1177 = vpack.c.b16 %v1153, %v1151
      %v1178 = vpack.c.b16 %v1156, %v1154
      %v1179 = vpack.c.b16 %v1157, %v1155
      %v1180 = vpack.c.b16 %v1160, %v1158
      %v1181 = vpack.c.b16 %v1161, %v1159
      %v1182 = vpack.c.b16 %v1164, %v1162
      %v1183 = vpack.c.b16 %v1165, %v1163
      %v1184 = vpack.c.b16 %v1168, %v1166
      %v1185 = vpack.c.b16 %v1169, %v1167
      %1202 = vmatprep.subr.bf16.mxu0 %v1185
      %1203 = vmatpush1.bf16.msra.mxu0 %v1184
      %1204 = vmatprep.subr.bf16.mxu0 %v1183
      %1205 = vmatpush1.bf16.msra.mxu0 %v1182
      %1206 = vmatprep.subr.bf16.mxu0 %v1181
      %1207 = vmatpush1.bf16.msra.mxu0 %v1180
      %1208 = vmatprep.subr.bf16.mxu0 %v1179
      %1209 = vmatpush1.bf16.msra.mxu0 %v1178
      %1210 = vmatprep.subr.bf16.mxu0 %v1177
      %1211 = vmatpush1.bf16.msra.mxu0 %v1176
      %1212 = vmatprep.subr.bf16.mxu0 %v1175
      %1213 = vmatpush1.bf16.msra.mxu0 %v1174
      %1214 = vmatprep.subr.bf16.mxu0 %v1173
      %1215 = vmatpush1.bf16.msra.mxu0 %v1172
      %1216 = vmatprep.subr.bf16.mxu0 %v1171
      %1217 = vmatpush1.bf16.msra.mxu0 %v1170
      %1218 = vmatprep.subr.bf16.mxu0 0
      %1219 = vmatpush2.bf16.msra.mxu0 0
      %1220 = vmatprep.subr.bf16.mxu0 0
      %1221 = vmatpush2.bf16.msra.mxu0 0
      %1222 = vmatprep.subr.bf16.mxu0 0
      %1223 = vmatpush2.bf16.msra.mxu0 0
      %1224 = vmatprep.subr.bf16.mxu0 0
      %1225 = vmatpush2.bf16.msra.mxu0 0
      %1226 = vmatprep.subr.bf16.mxu0 0
      %1227 = vmatpush2.bf16.msra.mxu0 0
      %1228 = vmatprep.subr.bf16.mxu0 0
      %1229 = vmatpush2.bf16.msra.mxu0 0
      %1230 = vmatprep.subr.bf16.mxu0 0
      %1231 = vmatpush2.bf16.msra.mxu0 0
      %1232 = vmatprep.subr.bf16.mxu0 0
      %1233 = vmatpush2.bf16.msra.mxu0 0
      %1234 = vmatprep.mubr.bf16.mxu0 0
      %1235 = vmatmul.mubr.bf16.gmra.mxu0 %v1106
      %v1236 = vpop.f32.mrf.mxu0
      %v1237 = vadd.f32 %v997, %v1236
      %v1238 = vpop.f32.mrf.mxu0
      %v1239 = vadd.f32 %v997, %v1238
      %v1240 = vpop.f32.mrf.mxu0
      %v1241 = vadd.f32 %v1002, %v1240
      %v1242 = vpop.f32.mrf.mxu0
      %v1243 = vadd.f32 %v1002, %v1242
      %1244 = vmatprep.mubr.bf16.mxu0 0
      %1245 = vmatmul.mubr.bf16.gmra.mxu0 %v1107
      %v1246 = vpop.f32.mrf.mxu0
      %v1247 = vadd.f32 %v1007, %v1246
      %v1248 = vpop.f32.mrf.mxu0
      %v1249 = vadd.f32 %v1007, %v1248
      %v1250 = vpop.f32.mrf.mxu0
      %v1251 = vadd.f32 %v1012, %v1250
      %v1252 = vpop.f32.mrf.mxu0
      %v1253 = vadd.f32 %v1012, %v1252
      %1254 = vmatprep.mubr.bf16.mxu0 0
      %1255 = vmatmul.mubr.bf16.gmra.mxu0 %v1108
      %v1256 = vpop.f32.mrf.mxu0
      %v1257 = vadd.f32 %v1017, %v1256
      %v1258 = vpop.f32.mrf.mxu0
      %v1259 = vadd.f32 %v1017, %v1258
      %v1260 = vpop.f32.mrf.mxu0
      %v1261 = vadd.f32 %v1022, %v1260
      %v1262 = vpop.f32.mrf.mxu0
      %v1263 = vadd.f32 %v1022, %v1262
      %1264 = vmatprep.mubr.bf16.mxu0 0
      %1265 = vmatmul.mubr.bf16.gmra.mxu0 %v1109
      %v1266 = vpop.f32.mrf.mxu0
      %v1267 = vadd.f32 %v1027, %v1266
      %v1268 = vpop.f32.mrf.mxu0
      %v1269 = vadd.f32 %v1027, %v1268
      %v1270 = vpop.f32.mrf.mxu0
      %v1271 = vadd.f32 %v1032, %v1270
      %v1272 = vpop.f32.mrf.mxu0
      %v1273 = vadd.f32 %v1032, %v1272
      %1274 = vmatprep.mubr.bf16.mxu0 0
      %1275 = vmatmul.mubr.bf16.gmra.mxu0 %v1110
      %v1276 = vpop.f32.mrf.mxu0
      %v1277 = vadd.f32 %v1037, %v1276
      %v1278 = vpop.f32.mrf.mxu0
      %v1279 = vadd.f32 %v1037, %v1278
      %v1280 = vpop.f32.mrf.mxu0
      %v1281 = vadd.f32 %v1042, %v1280
      %v1282 = vpop.f32.mrf.mxu0
      %v1283 = vadd.f32 %v1042, %v1282
      %1284 = vmatprep.mubr.bf16.mxu0 0
      %1285 = vmatmul.mubr.bf16.gmra.mxu0 %v1111
      %v1286 = vpop.f32.mrf.mxu0
      %v1287 = vadd.f32 %v1047, %v1286
      %v1288 = vpop.f32.mrf.mxu0
      %v1289 = vadd.f32 %v1047, %v1288
      %v1290 = vpop.f32.mrf.mxu0
      %v1291 = vadd.f32 %v1052, %v1290
      %v1292 = vpop.f32.mrf.mxu0
      %v1293 = vadd.f32 %v1052, %v1292
      %1294 = vmatprep.mubr.bf16.mxu0 0
      %1295 = vmatmul.mubr.bf16.gmra.mxu0 %v1112
      %v1296 = vpop.f32.mrf.mxu0
      %v1297 = vadd.f32 %v1057, %v1296
      %v1298 = vpop.f32.mrf.mxu0
      %v1299 = vadd.f32 %v1057, %v1298
      %v1300 = vpop.f32.mrf.mxu0
      %v1301 = vadd.f32 %v1062, %v1300
      %v1302 = vpop.f32.mrf.mxu0
      %v1303 = vadd.f32 %v1062, %v1302
      %1304 = vmatprep.mubr.bf16.mxu0 0
      %1305 = vmatmul.mubr.bf16.gmra.mxu0 %v1113
      %v1306 = vpop.f32.mrf.mxu0
      %v1307 = vadd.f32 %v1067, %v1306
      %v1308 = vpop.f32.mrf.mxu0
      %v1309 = vadd.f32 %v1067, %v1308
      %v1310 = vpop.f32.mrf.mxu0
      %v1311 = vadd.f32 %v1072, %v1310
      %v1312 = vpop.f32.mrf.mxu0
      %v1313 = vadd.f32 %v1072, %v1312
      %1314 = vdwg.mxu0
      %v1315 = vpack.c.bf16 %v1241, %v1237
      %v1316 = vpack.c.bf16 %v1243, %v1239
      %v1317 = vpack.c.bf16 %v1251, %v1247
      %v1318 = vpack.c.bf16 %v1253, %v1249
      %v1319 = vpack.c.bf16 %v1261, %v1257
      %v1320 = vpack.c.bf16 %v1263, %v1259
      %v1321 = vpack.c.bf16 %v1271, %v1267
      %v1322 = vpack.c.bf16 %v1273, %v1269
      %v1323 = vpack.c.bf16 %v1281, %v1277
      %v1324 = vpack.c.bf16 %v1283, %v1279
      %v1325 = vpack.c.bf16 %v1291, %v1287
      %v1326 = vpack.c.bf16 %v1293, %v1289
      %v1327 = vpack.c.bf16 %v1301, %v1297
      %v1328 = vpack.c.bf16 %v1303, %v1299
      %v1329 = vpack.c.bf16 %v1311, %v1307
      %v1330 = vpack.c.bf16 %v1313, %v1309
      %v1347 = vunpack.c.l.b16 %v1315
      %v1348 = vunpack.c.l.b16 %v1316
      %v1349 = vunpack.c.h.b16 %v1315
      %v1350 = vunpack.c.h.b16 %v1316
      %v1351 = vunpack.c.l.b16 %v1317
      %v1352 = vunpack.c.l.b16 %v1318
      %v1353 = vunpack.c.h.b16 %v1317
      %v1354 = vunpack.c.h.b16 %v1318
      %v1355 = vunpack.c.l.b16 %v1319
      %v1356 = vunpack.c.l.b16 %v1320
      %v1357 = vunpack.c.h.b16 %v1319
      %v1358 = vunpack.c.h.b16 %v1320
      %v1359 = vunpack.c.l.b16 %v1321
      %v1360 = vunpack.c.l.b16 %v1322
      %v1361 = vunpack.c.h.b16 %v1321
      %v1362 = vunpack.c.h.b16 %v1322
      %v1363 = vunpack.c.l.b16 %v1323
      %v1364 = vunpack.c.l.b16 %v1324
      %v1365 = vunpack.c.h.b16 %v1323
      %v1366 = vunpack.c.h.b16 %v1324
      %v1367 = vunpack.c.l.b16 %v1325
      %v1368 = vunpack.c.l.b16 %v1326
      %v1369 = vunpack.c.h.b16 %v1325
      %v1370 = vunpack.c.h.b16 %v1326
      %v1371 = vunpack.c.l.b16 %v1327
      %v1372 = vunpack.c.l.b16 %v1328
      %v1373 = vunpack.c.h.b16 %v1327
      %v1374 = vunpack.c.h.b16 %v1328
      %v1375 = vunpack.c.l.b16 %v1329
      %v1376 = vunpack.c.l.b16 %v1330
      %v1377 = vunpack.c.h.b16 %v1329
      %v1378 = vunpack.c.h.b16 %v1330
      %v1379 = vpack.c.b16 %v1348, %v1347
      %v1380 = vpack.c.b16 %v1350, %v1349
      %v1381 = vpack.c.b16 %v1352, %v1351
      %v1382 = vpack.c.b16 %v1354, %v1353
      %v1383 = vpack.c.b16 %v1356, %v1355
      %v1384 = vpack.c.b16 %v1358, %v1357
      %v1385 = vpack.c.b16 %v1360, %v1359
      %v1386 = vpack.c.b16 %v1362, %v1361
      %v1387 = vpack.c.b16 %v1364, %v1363
      %v1388 = vpack.c.b16 %v1366, %v1365
      %v1389 = vpack.c.b16 %v1368, %v1367
      %v1390 = vpack.c.b16 %v1370, %v1369
      %v1391 = vpack.c.b16 %v1372, %v1371
      %v1392 = vpack.c.b16 %v1374, %v1373
      %v1393 = vpack.c.b16 %v1376, %v1375
      %v1394 = vpack.c.b16 %v1378, %v1377
      %s1411 = smul.u32 16, 2
      %s1412 = smul.addr %s1411, 4
      %s1413 = scalar_lea.vmem %s312, %s1412
      %1414 = vst [vmem:[%s1413] sm:$0xff] %v1379
      %1415 = vst [vmem:[%s1413 + $0x8] sm:$0xff] %v1380
      %1416 = vst [vmem:[%s1413 + $0x10] sm:$0xff] %v1381
      %1417 = vst [vmem:[%s1413 + $0x18] sm:$0xff] %v1382
      %1418 = vst [vmem:[%s1413 + $0x20] sm:$0xff] %v1383
      %1419 = vst [vmem:[%s1413 + $0x28] sm:$0xff] %v1384
      %1420 = vst [vmem:[%s1413 + $0x30] sm:$0xff] %v1385
      %1421 = vst [vmem:[%s1413 + $0x38] sm:$0xff] %v1386
      %1422 = vst [vmem:[%s1413 + $0x40] sm:$0xff] %v1387
      %1423 = vst [vmem:[%s1413 + $0x48] sm:$0xff] %v1388
      %1424 = vst [vmem:[%s1413 + $0x50] sm:$0xff] %v1389
      %1425 = vst [vmem:[%s1413 + $0x58] sm:$0xff] %v1390
      %1426 = vst [vmem:[%s1413 + $0x60] sm:$0xff] %v1391
      %1427 = vst [vmem:[%s1413 + $0x68] sm:$0xff] %v1392
      %1428 = vst [vmem:[%s1413 + $0x70] sm:$0xff] %v1393
      %1429 = vst [vmem:[%s1413 + $0x78] sm:$0xff] %v1394
      %s1430 = scalar_lea.vmem %s323, 128
      %v1431 = vld [vmem:[%s1430] sm:$0xff]
      %v1432 = vld [vmem:[%s1430 + $0x8] sm:$0xff]
      %v1433 = vld [vmem:[%s1430 + $0x10] sm:$0xff]
      %v1434 = vld [vmem:[%s1430 + $0x18] sm:$0xff]
      %v1435 = vld [vmem:[%s1430 + $0x20] sm:$0xff]
      %v1436 = vld [vmem:[%s1430 + $0x28] sm:$0xff]
      %v1437 = vld [vmem:[%s1430 + $0x30] sm:$0xff]
      %v1438 = vld [vmem:[%s1430 + $0x38] sm:$0xff]
      %v1439 = vld [vmem:[%s1430 + $0x40] sm:$0xff]
      %v1440 = vld [vmem:[%s1430 + $0x48] sm:$0xff]
      %v1441 = vld [vmem:[%s1430 + $0x50] sm:$0xff]
      %v1442 = vld [vmem:[%s1430 + $0x58] sm:$0xff]
      %v1443 = vld [vmem:[%s1430 + $0x60] sm:$0xff]
      %v1444 = vld [vmem:[%s1430 + $0x68] sm:$0xff]
      %v1445 = vld [vmem:[%s1430 + $0x70] sm:$0xff]
      %v1446 = vld [vmem:[%s1430 + $0x78] sm:$0xff]
      %v1447 = vadd.f32 %v1237, %v1239
      %1448 = vadd.xlane.f32.xlu0 %v1447
      %v1449 = vpop.xlane.xlu0 %1448
      %v1450 = vadd.f32 %v1241, %v1243
      %1451 = vadd.xlane.f32.xlu0 %v1450
      %v1452 = vpop.xlane.xlu0 %1451
      %v1453 = vadd.f32 %v1247, %v1249
      %1454 = vadd.xlane.f32.xlu0 %v1453
      %v1455 = vpop.xlane.xlu0 %1454
      %v1456 = vadd.f32 %v1251, %v1253
      %1457 = vadd.xlane.f32.xlu0 %v1456
      %v1458 = vpop.xlane.xlu0 %1457
      %v1459 = vadd.f32 %v1257, %v1259
      %1460 = vadd.xlane.f32.xlu0 %v1459
      %v1461 = vpop.xlane.xlu0 %1460
      %v1462 = vadd.f32 %v1261, %v1263
      %1463 = vadd.xlane.f32.xlu0 %v1462
      %v1464 = vpop.xlane.xlu0 %1463
      %v1465 = vadd.f32 %v1267, %v1269
      %1466 = vadd.xlane.f32.xlu0 %v1465
      %v1467 = vpop.xlane.xlu0 %1466
      %v1468 = vadd.f32 %v1271, %v1273
      %1469 = vadd.xlane.f32.xlu0 %v1468
      %v1470 = vpop.xlane.xlu0 %1469
      %v1471 = vadd.f32 %v1277, %v1279
      %1472 = vadd.xlane.f32.xlu0 %v1471
      %v1473 = vpop.xlane.xlu0 %1472
      %v1474 = vadd.f32 %v1281, %v1283
      %1475 = vadd.xlane.f32.xlu0 %v1474
      %v1476 = vpop.xlane.xlu0 %1475
      %v1477 = vadd.f32 %v1287, %v1289
      %1478 = vadd.xlane.f32.xlu0 %v1477
      %v1479 = vpop.xlane.xlu0 %1478
      %v1480 = vadd.f32 %v1291, %v1293
      %1481 = vadd.xlane.f32.xlu0 %v1480
      %v1482 = vpop.xlane.xlu0 %1481
      %v1483 = vadd.f32 %v1297, %v1299
      %1484 = vadd.xlane.f32.xlu0 %v1483
      %v1485 = vpop.xlane.xlu0 %1484
      %v1486 = vadd.f32 %v1301, %v1303
      %1487 = vadd.xlane.f32.xlu0 %v1486
      %v1488 = vpop.xlane.xlu0 %1487
      %v1489 = vadd.f32 %v1307, %v1309
      %1490 = vadd.xlane.f32.xlu0 %v1489
      %v1491 = vpop.xlane.xlu0 %1490
      %v1492 = vadd.f32 %v1311, %v1313
      %1493 = vadd.xlane.f32.xlu0 %v1492
      %v1494 = vpop.xlane.xlu0 %1493
      %v1495 = vadd.f32 %v1431, %v1449
      %v1496 = vadd.f32 %v1432, %v1452
      %v1497 = vadd.f32 %v1433, %v1455
      %v1498 = vadd.f32 %v1434, %v1458
      %v1499 = vadd.f32 %v1435, %v1461
      %v1500 = vadd.f32 %v1436, %v1464
      %v1501 = vadd.f32 %v1437, %v1467
      %v1502 = vadd.f32 %v1438, %v1470
      %v1503 = vadd.f32 %v1439, %v1473
      %v1504 = vadd.f32 %v1440, %v1476
      %v1505 = vadd.f32 %v1441, %v1479
      %v1506 = vadd.f32 %v1442, %v1482
      %v1507 = vadd.f32 %v1443, %v1485
      %v1508 = vadd.f32 %v1444, %v1488
      %v1509 = vadd.f32 %v1445, %v1491
      %v1510 = vadd.f32 %v1446, %v1494
      %1511 = vst.msk [vmem:[%s1430] sm:$0xff] %vm927, %v1495
      %1512 = vst.msk [vmem:[%s1430 + $0x8] sm:$0xff] %vm927, %v1496
      %1513 = vst.msk [vmem:[%s1430 + $0x10] sm:$0xff] %vm927, %v1497
      %1514 = vst.msk [vmem:[%s1430 + $0x18] sm:$0xff] %vm927, %v1498
      %1515 = vst.msk [vmem:[%s1430 + $0x20] sm:$0xff] %vm927, %v1499
      %1516 = vst.msk [vmem:[%s1430 + $0x28] sm:$0xff] %vm927, %v1500
      %1517 = vst.msk [vmem:[%s1430 + $0x30] sm:$0xff] %vm927, %v1501
      %1518 = vst.msk [vmem:[%s1430 + $0x38] sm:$0xff] %vm927, %v1502
      %1519 = vst.msk [vmem:[%s1430 + $0x40] sm:$0xff] %vm927, %v1503
      %1520 = vst.msk [vmem:[%s1430 + $0x48] sm:$0xff] %vm927, %v1504
      %1521 = vst.msk [vmem:[%s1430 + $0x50] sm:$0xff] %vm927, %v1505
      %1522 = vst.msk [vmem:[%s1430 + $0x58] sm:$0xff] %vm927, %v1506
      %1523 = vst.msk [vmem:[%s1430 + $0x60] sm:$0xff] %vm927, %v1507
      %1524 = vst.msk [vmem:[%s1430 + $0x68] sm:$0xff] %vm927, %v1508
      %1525 = vst.msk [vmem:[%s1430 + $0x70] sm:$0xff] %vm927, %v1509
      %1526 = vst.msk [vmem:[%s1430 + $0x78] sm:$0xff] %vm927, %v1510
      %s1527 = smul.u32 32, %s22
      %s1528 = smul.u32 2, %s23
      %p1529 = scmp.lt.s32.totalorder %s21, 1
      %s1530 = scalar_select %p1529, %s21, 1
      %p1531 = scmp.lt.s32.totalorder %s1527, 255
      %s1532 = scalar_select %p1531, %s1527, 255
      %p1533 = scmp.lt.s32.totalorder %s1528, 1
      %s1534 = scalar_select %p1533, %s1528, 1
      %s1535 = smul.addr %s1532, 2
      %s1536 = sadd.s32 %s1534, %s1535
      %s1537 = smul.addr %s1530, 512
      %s1538 = sadd.s32 %s1536, %s1537
      %s1539 = smul.addr %s1538, 4
      %s1540 = scalar_lea.vmem %s3, %s1539
      %s1541 = smul.u32 32, %s22
      %p1542 = scmp.lt.s32.totalorder %s21, 1
      %s1543 = scalar_select %p1542, %s21, 1
      %p1544 = scmp.lt.s32.totalorder %s1541, 255
      %s1545 = scalar_select %p1544, %s1541, 255
      %s1546 = smul.addr %s1543, 256
      %s1547 = sadd.s32 %s1545, %s1546
      %s1548 = smul.addr %s1547, 8
      %s1549 = scalar_lea.vmem %s4, %s1548
      // Predicated region
      $region37: #{netc_forward.2} parent=31 // pred_check
        %p1550 = pneg %p137
      $region38: #{netc_forward.2} parent=31 // pred_check_branch
        %1552 = sbr.rel (%p1550) target = $region40
      $region39: #{netc_forward.2} parent=31 // pred_region
        %s1553 = smul.u32 32, %s22
        %s1554 = smul.u32 2, %s23
      $region40: #{netc_forward.2} parent=31 // pred_fallthru
        _
      // Predicated region
      $region41: #{netc_forward.2} parent=31 // pred_check
        %p1555 = pneg %p165
      $region42: #{netc_forward.2} parent=31 // pred_check_branch
        %1557 = sbr.rel (%p1555) target = $region44
      $region43: #{netc_forward.2} parent=31 // pred_region
        %s1558 = smul.u32 32, %s22
      $region44: #{netc_forward.2} parent=31 // pred_fallthru
        _
    $region32: #{netc_forward.2} parent=5 // pred_fallthru
      _
    %p1559 = scmp.le.s32.totalorder 2, %s11
    // Predicated region
    $region45: #{netc_forward.2} parent=5 // pred_check
      %p1560 = pneg %p1559
    $region46: #{netc_forward.2} parent=5 // pred_check_branch
      %1562 = sbr.rel (%p1560) target = $region48
    $region47: #{netc_forward.2} parent=5 // pred_region
      %s1563 = ssub.s32 %s11, 2
      // Predicated region
      $region49: #{netc_forward.2} parent=47 // pred_check
        %p1564 = pneg %p143
      $region50: #{netc_forward.2} parent=47 // pred_check_branch
        %1566 = sbr.rel (%p1564) target = $region52
      $region51: #{netc_forward.2} parent=47 // pred_region
        %s1567 = smul.u32 32, %s25
        %s1568 = smul.u32 2, %s26
        %p1569 = scmp.lt.s32.totalorder %s24, 1
        %s1570 = scalar_select %p1569, %s24, 1
        %p1571 = scmp.lt.s32.totalorder %s1567, 255
        %s1572 = scalar_select %p1571, %s1567, 255
        %p1573 = scmp.lt.s32.totalorder %s1568, 1
        %s1574 = scalar_select %p1573, %s1568, 1
        %s1575 = smul.addr %s1572, 2
        %s1576 = sadd.s32 %s1574, %s1575
        %s1577 = smul.addr %s1570, 512
        %s1578 = sadd.s32 %s1576, %s1577
        %s1579 = smul.addr %s1578, 4
        %s1580 = scalar_lea.vmem %s3, %s1579
      $region52: #{netc_forward.2} parent=47 // pred_fallthru
        _
      // Predicated region
      $region53: #{netc_forward.2} parent=47 // pred_check
        %p1581 = pneg %p171
      $region54: #{netc_forward.2} parent=47 // pred_check_branch
        %1583 = sbr.rel (%p1581) target = $region56
      $region55: #{netc_forward.2} parent=47 // pred_region
        %s1584 = smul.u32 32, %s25
        %p1585 = scmp.lt.s32.totalorder %s24, 1
        %s1586 = scalar_select %p1585, %s24, 1
        %p1587 = scmp.lt.s32.totalorder %s1584, 255
        %s1588 = scalar_select %p1587, %s1584, 255
        %s1589 = smul.addr %s1586, 256
        %s1590 = sadd.s32 %s1588, %s1589
        %s1591 = smul.addr %s1590, 8
        %s1592 = scalar_lea.vmem %s4, %s1591
      $region56: #{netc_forward.2} parent=47 // pred_fallthru
        _
    $region48: #{netc_forward.2} parent=5 // pred_fallthru
      _
  $region6: #{netc_forward.2} parent=0 // loop_footer
    %s15 = sadd.s32 1, %s11
  $region7: #{netc_forward.2} parent=0 // loop_footer_branch
    %10 = sbr.rel target = $region3
  $region8: #{netc_forward.2} parent=0 // loop_exit
    _

// kernel: netc_forward.3
$region0: #{netc_forward.3}
  #allocation0 [shape = 'u32[]', space=smem, size = 0x4, offset = 0x4, fixed_abs, tag = 'smem constant byte address 0x4 - core index']
  #allocation1 [shape = 'u32[144,128]{1,0:T(1,128)}', space=vmem, size = 0x12000, scoped, tag = 'internal scratch']
  %s0 = inlined_call_operand.vmem [shape: f32[2,2048], index: 0, kind: input, shape index: {}]
  %s1 = inlined_call_operand.vmem [shape: bf16[2048,128], index: 1, kind: input, shape index: {}]
  %s2 = inlined_call_operand.vmem [shape: f32[1,128], index: 2, kind: input, shape index: {}]
  %s3 = inlined_call_operand.hbm [shape: f32[2,128], index: 3, kind: output, shape index: {}]
  %s4 = sld [smem:[#allocation0]]
  $region22: #{netc_forward.3} parent=0
    _
  %s6 = ssub.s32 1, %s4
  %s7 = scalar_select 0, %s6, %s4
  $region1: #{netc_forward.3} parent=0
    #allocation2 [shape = 'u8[1024]{0}', space=vmem, size = 0x400, scoped, tag = 'output window, operand 0, single buffered']
    #allocation3 [shape = 's32[1]{0}', space=sflag, size = 0x4, scoped, tag = 'scoped memory for netc_forward.3']
    %8 = vsyncpa [#allocation3], 0
    // Predicated region
    $region2: #{netc_forward.3} parent=1 // pred_check
      _
    $region3: #{netc_forward.3} parent=1 // pred_check_branch
      %10 = sbr.rel (0) target = $region5
    $region4: #{netc_forward.3} parent=1 // pred_region
      _
    $region5: #{netc_forward.3} parent=1 // pred_fallthru
      _
    // Predicated region
    $region6: #{netc_forward.3} parent=1 // pred_check
      _
    $region7: #{netc_forward.3} parent=1 // pred_check_branch
      %12 = sbr.rel (0) target = $region9
    $region8: #{netc_forward.3} parent=1 // pred_region
      _
    $region9: #{netc_forward.3} parent=1 // pred_fallthru
      _
    // Predicated region
    $region10: #{netc_forward.3} parent=1 // pred_check
      _
    $region11: #{netc_forward.3} parent=1 // pred_check_branch
      %14 = sbr.rel (0) target = $region13
    $region12: #{netc_forward.3} parent=1 // pred_region
      _
    $region13: #{netc_forward.3} parent=1 // pred_fallthru
      _
    %v16 = vld [vmem:[%s0] sm:$0xff]
    %v17 = vld [vmem:[%s0 + $0x8] sm:$0xff]
    %v18 = vld [vmem:[%s0 + $0x10] sm:$0xff]
    %v19 = vld [vmem:[%s0 + $0x18] sm:$0xff]
    %v24 = vcombine.high %v16, %v16
    %v26 = vunpack.c.l.s4 1983009808
    %v27 = vunpack.c.0.s8 %v26
    %v28 = vlaneseq
    %v29 = vshrl.u32 %v28, 7
    %v30 = vsub.s32 %v27, %v29
    %v31 = vrot.slane %v16, %v30
    %v33 = vunpack.c.l.s4 1983009808
    %v34 = vunpack.c.0.s8 %v33
    %v35 = vlaneseq
    %v36 = vshrl.u32 %v35, 7
    %v37 = vsub.s32 %v34, %v36
    %v38 = vrot.slane %v24, %v37
    %v39 = vcombine.high %v31, %v31
    %v40 = vcombine.high %v38, %v38
    %v41 = vcombine.high %v17, %v17
    %v43 = vunpack.c.l.s4 1983009808
    %v44 = vunpack.c.0.s8 %v43
    %v45 = vlaneseq
    %v46 = vshrl.u32 %v45, 7
    %v47 = vsub.s32 %v44, %v46
    %v48 = vrot.slane %v17, %v47
    %v50 = vunpack.c.l.s4 1983009808
    %v51 = vunpack.c.0.s8 %v50
    %v52 = vlaneseq
    %v53 = vshrl.u32 %v52, 7
    %v54 = vsub.s32 %v51, %v53
    %v55 = vrot.slane %v41, %v54
    %v56 = vcombine.high %v48, %v48
    %v57 = vcombine.high %v55, %v55
    %v58 = vcombine.high %v18, %v18
    %v60 = vunpack.c.l.s4 1983009808
    %v61 = vunpack.c.0.s8 %v60
    %v62 = vlaneseq
    %v63 = vshrl.u32 %v62, 7
    %v64 = vsub.s32 %v61, %v63
    %v65 = vrot.slane %v18, %v64
    %v67 = vunpack.c.l.s4 1983009808
    %v68 = vunpack.c.0.s8 %v67
    %v69 = vlaneseq
    %v70 = vshrl.u32 %v69, 7
    %v71 = vsub.s32 %v68, %v70
    %v72 = vrot.slane %v58, %v71
    %v73 = vcombine.high %v65, %v65
    %v74 = vcombine.high %v72, %v72
    %v75 = vcombine.high %v19, %v19
    %v77 = vunpack.c.l.s4 1983009808
    %v78 = vunpack.c.0.s8 %v77
    %v79 = vlaneseq
    %v80 = vshrl.u32 %v79, 7
    %v81 = vsub.s32 %v78, %v80
    %v82 = vrot.slane %v19, %v81
    %v84 = vunpack.c.l.s4 1983009808
    %v85 = vunpack.c.0.s8 %v84
    %v86 = vlaneseq
    %v87 = vshrl.u32 %v86, 7
    %v88 = vsub.s32 %v85, %v87
    %v89 = vrot.slane %v75, %v88
    %v90 = vcombine.high %v82, %v82
    %v91 = vcombine.high %v89, %v89
    %v108 = vpack.c.bf16 %v31, %v31
    %v109 = vpack.c.bf16 %v39, %v39
    %v110 = vpack.c.bf16 %v38, %v38
    %v111 = vpack.c.bf16 %v40, %v40
    %v112 = vpack.c.bf16 %v48, %v48
    %v113 = vpack.c.bf16 %v56, %v56
    %v114 = vpack.c.bf16 %v55, %v55
    %v115 = vpack.c.bf16 %v57, %v57
    %v116 = vpack.c.bf16 %v65, %v65
    %v117 = vpack.c.bf16 %v73, %v73
    %v118 = vpack.c.bf16 %v72, %v72
    %v119 = vpack.c.bf16 %v74, %v74
    %v120 = vpack.c.bf16 %v82, %v82
    %v121 = vpack.c.bf16 %v90, %v90
    %v122 = vpack.c.bf16 %v89, %v89
    %v123 = vpack.c.bf16 %v91, %v91
    %v124 = vld [vmem:[%s1] sm:$0xf]
    %v125 = vld [vmem:[%s1 + $0x4] sm:$0xf]
    %v126 = vld [vmem:[%s1 + $0x8] sm:$0xf]
    %v127 = vld [vmem:[%s1 + $0xc] sm:$0xf]
    %v128 = vld [vmem:[%s1 + $0x10] sm:$0xf]
    %v129 = vld [vmem:[%s1 + $0x14] sm:$0xf]
    %v130 = vld [vmem:[%s1 + $0x18] sm:$0xf]
    %v131 = vld [vmem:[%s1 + $0x1c] sm:$0xf]
    %v132 = vld [vmem:[%s1 + $0x20] sm:$0xf]
    %v133 = vld [vmem:[%s1 + $0x24] sm:$0xf]
    %v134 = vld [vmem:[%s1 + $0x28] sm:$0xf]
    %v135 = vld [vmem:[%s1 + $0x2c] sm:$0xf]
    %v136 = vld [vmem:[%s1 + $0x30] sm:$0xf]
    %v137 = vld [vmem:[%s1 + $0x34] sm:$0xf]
    %v138 = vld [vmem:[%s1 + $0x38] sm:$0xf]
    %v139 = vld [vmem:[%s1 + $0x3c] sm:$0xf]
    %v140 = vld [vmem:[%s1 + $0x40] sm:$0xf]
    %v141 = vld [vmem:[%s1 + $0x44] sm:$0xf]
    %v142 = vld [vmem:[%s1 + $0x48] sm:$0xf]
    %v143 = vld [vmem:[%s1 + $0x4c] sm:$0xf]
    %v144 = vld [vmem:[%s1 + $0x50] sm:$0xf]
    %v145 = vld [vmem:[%s1 + $0x54] sm:$0xf]
    %v146 = vld [vmem:[%s1 + $0x58] sm:$0xf]
    %v147 = vld [vmem:[%s1 + $0x5c] sm:$0xf]
    %v148 = vld [vmem:[%s1 + $0x60] sm:$0xf]
    %v149 = vld [vmem:[%s1 + $0x64] sm:$0xf]
    %v150 = vld [vmem:[%s1 + $0x68] sm:$0xf]
    %v151 = vld [vmem:[%s1 + $0x6c] sm:$0xf]
    %v152 = vld [vmem:[%s1 + $0x70] sm:$0xf]
    %v153 = vld [vmem:[%s1 + $0x74] sm:$0xf]
    %v154 = vld [vmem:[%s1 + $0x78] sm:$0xf]
    %v155 = vld [vmem:[%s1 + $0x7c] sm:$0xf]
    %v156 = vld [vmem:[%s1 + $0x80] sm:$0xf]
    %v157 = vld [vmem:[%s1 + $0x84] sm:$0xf]
    %v158 = vld [vmem:[%s1 + $0x88] sm:$0xf]
    %v159 = vld [vmem:[%s1 + $0x8c] sm:$0xf]
    %v160 = vld [vmem:[%s1 + $0x90] sm:$0xf]
    %v161 = vld [vmem:[%s1 + $0x94] sm:$0xf]
    %v162 = vld [vmem:[%s1 + $0x98] sm:$0xf]
    %v163 = vld [vmem:[%s1 + $0x9c] sm:$0xf]
    %v164 = vld [vmem:[%s1 + $0xa0] sm:$0xf]
    %v165 = vld [vmem:[%s1 + $0xa4] sm:$0xf]
    %v166 = vld [vmem:[%s1 + $0xa8] sm:$0xf]
    %v167 = vld [vmem:[%s1 + $0xac] sm:$0xf]
    %v168 = vld [vmem:[%s1 + $0xb0] sm:$0xf]
    %v169 = vld [vmem:[%s1 + $0xb4] sm:$0xf]
    %v170 = vld [vmem:[%s1 + $0xb8] sm:$0xf]
    %v171 = vld [vmem:[%s1 + $0xbc] sm:$0xf]
    %v172 = vld [vmem:[%s1 + $0xc0] sm:$0xf]
    %v173 = vld [vmem:[%s1 + $0xc4] sm:$0xf]
    %v174 = vld [vmem:[%s1 + $0xc8] sm:$0xf]
    %v175 = vld [vmem:[%s1 + $0xcc] sm:$0xf]
    %v176 = vld [vmem:[%s1 + $0xd0] sm:$0xf]
    %v177 = vld [vmem:[%s1 + $0xd4] sm:$0xf]
    %v178 = vld [vmem:[%s1 + $0xd8] sm:$0xf]
    %v179 = vld [vmem:[%s1 + $0xdc] sm:$0xf]
    %v180 = vld [vmem:[%s1 + $0xe0] sm:$0xf]
    %v181 = vld [vmem:[%s1 + $0xe4] sm:$0xf]
    %v182 = vld [vmem:[%s1 + $0xe8] sm:$0xf]
    %v183 = vld [vmem:[%s1 + $0xec] sm:$0xf]
    %v184 = vld [vmem:[%s1 + $0xf0] sm:$0xf]
    %v185 = vld [vmem:[%s1 + $0xf4] sm:$0xf]
    %v186 = vld [vmem:[%s1 + $0xf8] sm:$0xf]
    %v187 = vld [vmem:[%s1 + $0xfc] sm:$0xf]
    %v188 = vld [vmem:[%s1 + $0x100] sm:$0xf]
    %v189 = vld [vmem:[%s1 + $0x104] sm:$0xf]
    %v190 = vld [vmem:[%s1 + $0x108] sm:$0xf]
    %v191 = vld [vmem:[%s1 + $0x10c] sm:$0xf]
    %v192 = vld [vmem:[%s1 + $0x110] sm:$0xf]
    %v193 = vld [vmem:[%s1 + $0x114] sm:$0xf]
    %v194 = vld [vmem:[%s1 + $0x118] sm:$0xf]
    %v195 = vld [vmem:[%s1 + $0x11c] sm:$0xf]
    %v196 = vld [vmem:[%s1 + $0x120] sm:$0xf]
    %v197 = vld [vmem:[%s1 + $0x124] sm:$0xf]
    %v198 = vld [vmem:[%s1 + $0x128] sm:$0xf]
    %v199 = vld [vmem:[%s1 + $0x12c] sm:$0xf]
    %v200 = vld [vmem:[%s1 + $0x130] sm:$0xf]
    %v201 = vld [vmem:[%s1 + $0x134] sm:$0xf]
    %v202 = vld [vmem:[%s1 + $0x138] sm:$0xf]
    %v203 = vld [vmem:[%s1 + $0x13c] sm:$0xf]
    %v204 = vld [vmem:[%s1 + $0x140] sm:$0xf]
    %v205 = vld [vmem:[%s1 + $0x144] sm:$0xf]
    %v206 = vld [vmem:[%s1 + $0x148] sm:$0xf]
    %v207 = vld [vmem:[%s1 + $0x14c] sm:$0xf]
    %v208 = vld [vmem:[%s1 + $0x150] sm:$0xf]
    %v209 = vld [vmem:[%s1 + $0x154] sm:$0xf]
    %v210 = vld [vmem:[%s1 + $0x158] sm:$0xf]
    %v211 = vld [vmem:[%s1 + $0x15c] sm:$0xf]
    %v212 = vld [vmem:[%s1 + $0x160] sm:$0xf]
    %v213 = vld [vmem:[%s1 + $0x164] sm:$0xf]
    %v214 = vld [vmem:[%s1 + $0x168] sm:$0xf]
    %v215 = vld [vmem:[%s1 + $0x16c] sm:$0xf]
    %v216 = vld [vmem:[%s1 + $0x170] sm:$0xf]
    %v217 = vld [vmem:[%s1 + $0x174] sm:$0xf]
    %v218 = vld [vmem:[%s1 + $0x178] sm:$0xf]
    %v219 = vld [vmem:[%s1 + $0x17c] sm:$0xf]
    %v220 = vld [vmem:[%s1 + $0x180] sm:$0xf]
    %v221 = vld [vmem:[%s1 + $0x184] sm:$0xf]
    %v222 = vld [vmem:[%s1 + $0x188] sm:$0xf]
    %v223 = vld [vmem:[%s1 + $0x18c] sm:$0xf]
    %v224 = vld [vmem:[%s1 + $0x190] sm:$0xf]
    %v225 = vld [vmem:[%s1 + $0x194] sm:$0xf]
    %v226 = vld [vmem:[%s1 + $0x198] sm:$0xf]
    %v227 = vld [vmem:[%s1 + $0x19c] sm:$0xf]
    %v228 = vld [vmem:[%s1 + $0x1a0] sm:$0xf]
    %v229 = vld [vmem:[%s1 + $0x1a4] sm:$0xf]
    %v230 = vld [vmem:[%s1 + $0x1a8] sm:$0xf]
    %v231 = vld [vmem:[%s1 + $0x1ac] sm:$0xf]
    %v232 = vld [vmem:[%s1 + $0x1b0] sm:$0xf]
    %v233 = vld [vmem:[%s1 + $0x1b4] sm:$0xf]
    %v234 = vld [vmem:[%s1 + $0x1b8] sm:$0xf]
    %v235 = vld [vmem:[%s1 + $0x1bc] sm:$0xf]
    %v236 = vld [vmem:[%s1 + $0x1c0] sm:$0xf]
    %v237 = vld [vmem:[%s1 + $0x1c4] sm:$0xf]
    %v238 = vld [vmem:[%s1 + $0x1c8] sm:$0xf]
    %v239 = vld [vmem:[%s1 + $0x1cc] sm:$0xf]
    %v240 = vld [vmem:[%s1 + $0x1d0] sm:$0xf]
    %v241 = vld [vmem:[%s1 + $0x1d4] sm:$0xf]
    %v242 = vld [vmem:[%s1 + $0x1d8] sm:$0xf]
    %v243 = vld [vmem:[%s1 + $0x1dc] sm:$0xf]
    %v244 = vld [vmem:[%s1 + $0x1e0] sm:$0xf]
    %v245 = vld [vmem:[%s1 + $0x1e4] sm:$0xf]
    %v246 = vld [vmem:[%s1 + $0x1e8] sm:$0xf]
    %v247 = vld [vmem:[%s1 + $0x1ec] sm:$0xf]
    %v248 = vld [vmem:[%s1 + $0x1f0] sm:$0xf]
    %v249 = vld [vmem:[%s1 + $0x1f4] sm:$0xf]
    %v250 = vld [vmem:[%s1 + $0x1f8] sm:$0xf]
    %v251 = vld [vmem:[%s1 + $0x1fc] sm:$0xf]
    %v252 = vld [vmem:[%s1 + $0x200] sm:$0xf]
    %v253 = vld [vmem:[%s1 + $0x204] sm:$0xf]
    %v254 = vld [vmem:[%s1 + $0x208] sm:$0xf]
    %v255 = vld [vmem:[%s1 + $0x20c] sm:$0xf]
    %v256 = vld [vmem:[%s1 + $0x210] sm:$0xf]
    %v257 = vld [vmem:[%s1 + $0x214] sm:$0xf]
    %v258 = vld [vmem:[%s1 + $0x218] sm:$0xf]
    %v259 = vld [vmem:[%s1 + $0x21c] sm:$0xf]
    %v260 = vld [vmem:[%s1 + $0x220] sm:$0xf]
    %v261 = vld [vmem:[%s1 + $0x224] sm:$0xf]
    %v262 = vld [vmem:[%s1 + $0x228] sm:$0xf]
    %v263 = vld [vmem:[%s1 + $0x22c] sm:$0xf]
    %v264 = vld [vmem:[%s1 + $0x230] sm:$0xf]
    %v265 = vld [vmem:[%s1 + $0x234] sm:$0xf]
    %v266 = vld [vmem:[%s1 + $0x238] sm:$0xf]
    %v267 = vld [vmem:[%s1 + $0x23c] sm:$0xf]
    %v268 = vld [vmem:[%s1 + $0x240] sm:$0xf]
    %v269 = vld [vmem:[%s1 + $0x244] sm:$0xf]
    %v270 = vld [vmem:[%s1 + $0x248] sm:$0xf]
    %v271 = vld [vmem:[%s1 + $0x24c] sm:$0xf]
    %v272 = vld [vmem:[%s1 + $0x250] sm:$0xf]
    %v273 = vld [vmem:[%s1 + $0x254] sm:$0xf]
    %v274 = vld [vmem:[%s1 + $0x258] sm:$0xf]
    %v275 = vld [vmem:[%s1 + $0x25c] sm:$0xf]
    %v276 = vld [vmem:[%s1 + $0x260] sm:$0xf]
    %v277 = vld [vmem:[%s1 + $0x264] sm:$0xf]
    %v278 = vld [vmem:[%s1 + $0x268] sm:$0xf]
    %v279 = vld [vmem:[%s1 + $0x26c] sm:$0xf]
    %v280 = vld [vmem:[%s1 + $0x270] sm:$0xf]
    %v281 = vld [vmem:[%s1 + $0x274] sm:$0xf]
    %v282 = vld [vmem:[%s1 + $0x278] sm:$0xf]
    %v283 = vld [vmem:[%s1 + $0x27c] sm:$0xf]
    %v284 = vld [vmem:[%s1 + $0x280] sm:$0xf]
    %v285 = vld [vmem:[%s1 + $0x284] sm:$0xf]
    %v286 = vld [vmem:[%s1 + $0x288] sm:$0xf]
    %v287 = vld [vmem:[%s1 + $0x28c] sm:$0xf]
    %v288 = vld [vmem:[%s1 + $0x290] sm:$0xf]
    %v289 = vld [vmem:[%s1 + $0x294] sm:$0xf]
    %v290 = vld [vmem:[%s1 + $0x298] sm:$0xf]
    %v291 = vld [vmem:[%s1 + $0x29c] sm:$0xf]
    %v292 = vld [vmem:[%s1 + $0x2a0] sm:$0xf]
    %v293 = vld [vmem:[%s1 + $0x2a4] sm:$0xf]
    %v294 = vld [vmem:[%s1 + $0x2a8] sm:$0xf]
    %v295 = vld [vmem:[%s1 + $0x2ac] sm:$0xf]
    %v296 = vld [vmem:[%s1 + $0x2b0] sm:$0xf]
    %v297 = vld [vmem:[%s1 + $0x2b4] sm:$0xf]
    %v298 = vld [vmem:[%s1 + $0x2b8] sm:$0xf]
    %v299 = vld [vmem:[%s1 + $0x2bc] sm:$0xf]
    %v300 = vld [vmem:[%s1 + $0x2c0] sm:$0xf]
    %v301 = vld [vmem:[%s1 + $0x2c4] sm:$0xf]
    %v302 = vld [vmem:[%s1 + $0x2c8] sm:$0xf]
    %v303 = vld [vmem:[%s1 + $0x2cc] sm:$0xf]
    %v304 = vld [vmem:[%s1 + $0x2d0] sm:$0xf]
    %v305 = vld [vmem:[%s1 + $0x2d4] sm:$0xf]
    %v306 = vld [vmem:[%s1 + $0x2d8] sm:$0xf]
    %v307 = vld [vmem:[%s1 + $0x2dc] sm:$0xf]
    %v308 = vld [vmem:[%s1 + $0x2e0] sm:$0xf]
    %v309 = vld [vmem:[%s1 + $0x2e4] sm:$0xf]
    %v310 = vld [vmem:[%s1 + $0x2e8] sm:$0xf]
    %v311 = vld [vmem:[%s1 + $0x2ec] sm:$0xf]
    %v312 = vld [vmem:[%s1 + $0x2f0] sm:$0xf]
    %v313 = vld [vmem:[%s1 + $0x2f4] sm:$0xf]
    %v314 = vld [vmem:[%s1 + $0x2f8] sm:$0xf]
    %v315 = vld [vmem:[%s1 + $0x2fc] sm:$0xf]
    %v316 = vld [vmem:[%s1 + $0x300] sm:$0xf]
    %v317 = vld [vmem:[%s1 + $0x304] sm:$0xf]
    %v318 = vld [vmem:[%s1 + $0x308] sm:$0xf]
    %v319 = vld [vmem:[%s1 + $0x30c] sm:$0xf]
    %v320 = vld [vmem:[%s1 + $0x310] sm:$0xf]
    %v321 = vld [vmem:[%s1 + $0x314] sm:$0xf]
    %v322 = vld [vmem:[%s1 + $0x318] sm:$0xf]
    %v323 = vld [vmem:[%s1 + $0x31c] sm:$0xf]
    %v324 = vld [vmem:[%s1 + $0x320] sm:$0xf]
    %v325 = vld [vmem:[%s1 + $0x324] sm:$0xf]
    %v326 = vld [vmem:[%s1 + $0x328] sm:$0xf]
    %v327 = vld [vmem:[%s1 + $0x32c] sm:$0xf]
    %v328 = vld [vmem:[%s1 + $0x330] sm:$0xf]
    %v329 = vld [vmem:[%s1 + $0x334] sm:$0xf]
    %v330 = vld [vmem:[%s1 + $0x338] sm:$0xf]
    %v331 = vld [vmem:[%s1 + $0x33c] sm:$0xf]
    %v332 = vld [vmem:[%s1 + $0x340] sm:$0xf]
    %v333 = vld [vmem:[%s1 + $0x344] sm:$0xf]
    %v334 = vld [vmem:[%s1 + $0x348] sm:$0xf]
    %v335 = vld [vmem:[%s1 + $0x34c] sm:$0xf]
    %v336 = vld [vmem:[%s1 + $0x350] sm:$0xf]
    %v337 = vld [vmem:[%s1 + $0x354] sm:$0xf]
    %v338 = vld [vmem:[%s1 + $0x358] sm:$0xf]
    %v339 = vld [vmem:[%s1 + $0x35c] sm:$0xf]
    %v340 = vld [vmem:[%s1 + $0x360] sm:$0xf]
    %v341 = vld [vmem:[%s1 + $0x364] sm:$0xf]
    %v342 = vld [vmem:[%s1 + $0x368] sm:$0xf]
    %v343 = vld [vmem:[%s1 + $0x36c] sm:$0xf]
    %v344 = vld [vmem:[%s1 + $0x370] sm:$0xf]
    %v345 = vld [vmem:[%s1 + $0x374] sm:$0xf]
    %v346 = vld [vmem:[%s1 + $0x378] sm:$0xf]
    %v347 = vld [vmem:[%s1 + $0x37c] sm:$0xf]
    %v348 = vld [vmem:[%s1 + $0x380] sm:$0xf]
    %v349 = vld [vmem:[%s1 + $0x384] sm:$0xf]
    %v350 = vld [vmem:[%s1 + $0x388] sm:$0xf]
    %v351 = vld [vmem:[%s1 + $0x38c] sm:$0xf]
    %v352 = vld [vmem:[%s1 + $0x390] sm:$0xf]
    %v353 = vld [vmem:[%s1 + $0x394] sm:$0xf]
    %v354 = vld [vmem:[%s1 + $0x398] sm:$0xf]
    %v355 = vld [vmem:[%s1 + $0x39c] sm:$0xf]
    %v356 = vld [vmem:[%s1 + $0x3a0] sm:$0xf]
    %v357 = vld [vmem:[%s1 + $0x3a4] sm:$0xf]
    %v358 = vld [vmem:[%s1 + $0x3a8] sm:$0xf]
    %v359 = vld [vmem:[%s1 + $0x3ac] sm:$0xf]
    %v360 = vld [vmem:[%s1 + $0x3b0] sm:$0xf]
    %v361 = vld [vmem:[%s1 + $0x3b4] sm:$0xf]
    %v362 = vld [vmem:[%s1 + $0x3b8] sm:$0xf]
    %v363 = vld [vmem:[%s1 + $0x3bc] sm:$0xf]
    %v364 = vld [vmem:[%s1 + $0x3c0] sm:$0xf]
    %v365 = vld [vmem:[%s1 + $0x3c4] sm:$0xf]
    %v366 = vld [vmem:[%s1 + $0x3c8] sm:$0xf]
    %v367 = vld [vmem:[%s1 + $0x3cc] sm:$0xf]
    %v368 = vld [vmem:[%s1 + $0x3d0] sm:$0xf]
    %v369 = vld [vmem:[%s1 + $0x3d4] sm:$0xf]
    %v370 = vld [vmem:[%s1 + $0x3d8] sm:$0xf]
    %v371 = vld [vmem:[%s1 + $0x3dc] sm:$0xf]
    %v372 = vld [vmem:[%s1 + $0x3e0] sm:$0xf]
    %v373 = vld [vmem:[%s1 + $0x3e4] sm:$0xf]
    %v374 = vld [vmem:[%s1 + $0x3e8] sm:$0xf]
    %v375 = vld [vmem:[%s1 + $0x3ec] sm:$0xf]
    %v376 = vld [vmem:[%s1 + $0x3f0] sm:$0xf]
    %v377 = vld [vmem:[%s1 + $0x3f4] sm:$0xf]
    %v378 = vld [vmem:[%s1 + $0x3f8] sm:$0xf]
    %v379 = vld [vmem:[%s1 + $0x3fc] sm:$0xf]
    %v380 = vld [vmem:[%s2] sm:$0x1]
    %v382 = vlaneseq
    %v383 = vshrl.u32 %v382, 7
    %v384 = vsub.s32 0, %v383
    %v385 = vrot.slane %v380, %v384
    %v643 = vunpack.c.l.b16 %v124
    %v644 = vunpack.c.l.b16 %v125
    %v645 = vunpack.c.l.b16 %v126
    %v646 = vunpack.c.l.b16 %v127
    %v647 = vunpack.c.l.b16 %v128
    %v648 = vunpack.c.l.b16 %v129
    %v649 = vunpack.c.l.b16 %v130
    %v650 = vunpack.c.l.b16 %v131
    %v651 = vunpack.c.l.b16 %v132
    %v652 = vunpack.c.l.b16 %v133
    %v653 = vunpack.c.l.b16 %v134
    %v654 = vunpack.c.l.b16 %v135
    %v655 = vunpack.c.l.b16 %v136
    %v656 = vunpack.c.l.b16 %v137
    %v657 = vunpack.c.l.b16 %v138
    %v658 = vunpack.c.l.b16 %v139
    %v659 = vunpack.c.l.b16 %v140
    %v660 = vunpack.c.l.b16 %v141
    %v661 = vunpack.c.l.b16 %v142
    %v662 = vunpack.c.l.b16 %v143
    %v663 = vunpack.c.l.b16 %v144
    %v664 = vunpack.c.l.b16 %v145
    %v665 = vunpack.c.l.b16 %v146
    %v666 = vunpack.c.l.b16 %v147
    %v667 = vunpack.c.l.b16 %v148
    %v668 = vunpack.c.l.b16 %v149
    %v669 = vunpack.c.l.b16 %v150
    %v670 = vunpack.c.l.b16 %v151
    %v671 = vunpack.c.l.b16 %v152
    %v672 = vunpack.c.l.b16 %v153
    %v673 = vunpack.c.l.b16 %v154
    %v674 = vunpack.c.l.b16 %v155
    %v675 = vunpack.c.l.b16 %v156
    %v676 = vunpack.c.l.b16 %v157
    %v677 = vunpack.c.l.b16 %v158
    %v678 = vunpack.c.l.b16 %v159
    %v679 = vunpack.c.l.b16 %v160
    %v680 = vunpack.c.l.b16 %v161
    %v681 = vunpack.c.l.b16 %v162
    %v682 = vunpack.c.l.b16 %v163
    %v683 = vunpack.c.l.b16 %v164
    %v684 = vunpack.c.l.b16 %v165
    %v685 = vunpack.c.l.b16 %v166
    %v686 = vunpack.c.l.b16 %v167
    %v687 = vunpack.c.l.b16 %v168
    %v688 = vunpack.c.l.b16 %v169
    %v689 = vunpack.c.l.b16 %v170
    %v690 = vunpack.c.l.b16 %v171
    %v691 = vunpack.c.l.b16 %v172
    %v692 = vunpack.c.l.b16 %v173
    %v693 = vunpack.c.l.b16 %v174
    %v694 = vunpack.c.l.b16 %v175
    %v695 = vunpack.c.l.b16 %v176
    %v696 = vunpack.c.l.b16 %v177
    %v697 = vunpack.c.l.b16 %v178
    %v698 = vunpack.c.l.b16 %v179
    %v699 = vunpack.c.l.b16 %v180
    %v700 = vunpack.c.l.b16 %v181
    %v701 = vunpack.c.l.b16 %v182
    %v702 = vunpack.c.l.b16 %v183
    %v703 = vunpack.c.l.b16 %v184
    %v704 = vunpack.c.l.b16 %v185
    %v705 = vunpack.c.l.b16 %v186
    %v706 = vunpack.c.l.b16 %v187
    %v707 = vunpack.c.l.b16 %v188
    %v708 = vunpack.c.l.b16 %v189
    %v709 = vunpack.c.l.b16 %v190
    %v710 = vunpack.c.l.b16 %v191
    %v711 = vunpack.c.l.b16 %v192
    %v712 = vunpack.c.l.b16 %v193
    %v713 = vunpack.c.l.b16 %v194
    %v714 = vunpack.c.l.b16 %v195
    %v715 = vunpack.c.l.b16 %v196
    %v716 = vunpack.c.l.b16 %v197
    %v717 = vunpack.c.l.b16 %v198
    %v718 = vunpack.c.l.b16 %v199
    %v719 = vunpack.c.l.b16 %v200
    %v720 = vunpack.c.l.b16 %v201
    %v721 = vunpack.c.l.b16 %v202
    %v722 = vunpack.c.l.b16 %v203
    %v723 = vunpack.c.l.b16 %v204
    %v724 = vunpack.c.l.b16 %v205
    %v725 = vunpack.c.l.b16 %v206
    %v726 = vunpack.c.l.b16 %v207
    %v727 = vunpack.c.l.b16 %v208
    %v728 = vunpack.c.l.b16 %v209
    %v729 = vunpack.c.l.b16 %v210
    %v730 = vunpack.c.l.b16 %v211
    %v731 = vunpack.c.l.b16 %v212
    %v732 = vunpack.c.l.b16 %v213
    %v733 = vunpack.c.l.b16 %v214
    %v734 = vunpack.c.l.b16 %v215
    %v735 = vunpack.c.l.b16 %v216
    %v736 = vunpack.c.l.b16 %v217
    %v737 = vunpack.c.l.b16 %v218
    %v738 = vunpack.c.l.b16 %v219
    %v739 = vunpack.c.l.b16 %v220
    %v740 = vunpack.c.l.b16 %v221
    %v741 = vunpack.c.l.b16 %v222
    %v742 = vunpack.c.l.b16 %v223
    %v743 = vunpack.c.l.b16 %v224
    %v744 = vunpack.c.l.b16 %v225
    %v745 = vunpack.c.l.b16 %v226
    %v746 = vunpack.c.l.b16 %v227
    %v747 = vunpack.c.l.b16 %v228
    %v748 = vunpack.c.l.b16 %v229
    %v749 = vunpack.c.l.b16 %v230
    %v750 = vunpack.c.l.b16 %v231
    %v751 = vunpack.c.l.b16 %v232
    %v752 = vunpack.c.l.b16 %v233
    %v753 = vunpack.c.l.b16 %v234
    %v754 = vunpack.c.l.b16 %v235
    %v755 = vunpack.c.l.b16 %v236
    %v756 = vunpack.c.l.b16 %v237
    %v757 = vunpack.c.l.b16 %v238
    %v758 = vunpack.c.l.b16 %v239
    %v759 = vunpack.c.l.b16 %v240
    %v760 = vunpack.c.l.b16 %v241
    %v761 = vunpack.c.l.b16 %v242
    %v762 = vunpack.c.l.b16 %v243
    %v763 = vunpack.c.l.b16 %v244
    %v764 = vunpack.c.l.b16 %v245
    %v765 = vunpack.c.l.b16 %v246
    %v766 = vunpack.c.l.b16 %v247
    %v767 = vunpack.c.l.b16 %v248
    %v768 = vunpack.c.l.b16 %v249
    %v769 = vunpack.c.l.b16 %v250
    %v770 = vunpack.c.l.b16 %v251
    %v771 = vunpack.c.l.b16 %v252
    %v772 = vunpack.c.l.b16 %v253
    %v773 = vunpack.c.l.b16 %v254
    %v774 = vunpack.c.l.b16 %v255
    %v775 = vunpack.c.l.b16 %v256
    %v776 = vunpack.c.l.b16 %v257
    %v777 = vunpack.c.l.b16 %v258
    %v778 = vunpack.c.l.b16 %v259
    %v779 = vunpack.c.l.b16 %v260
    %v780 = vunpack.c.l.b16 %v261
    %v781 = vunpack.c.l.b16 %v262
    %v782 = vunpack.c.l.b16 %v263
    %v783 = vunpack.c.l.b16 %v264
    %v784 = vunpack.c.l.b16 %v265
    %v785 = vunpack.c.l.b16 %v266
    %v786 = vunpack.c.l.b16 %v267
    %v787 = vunpack.c.l.b16 %v268
    %v788 = vunpack.c.l.b16 %v269
    %v789 = vunpack.c.l.b16 %v270
    %v790 = vunpack.c.l.b16 %v271
    %v791 = vunpack.c.l.b16 %v272
    %v792 = vunpack.c.l.b16 %v273
    %v793 = vunpack.c.l.b16 %v274
    %v794 = vunpack.c.l.b16 %v275
    %v795 = vunpack.c.l.b16 %v276
    %v796 = vunpack.c.l.b16 %v277
    %v797 = vunpack.c.l.b16 %v278
    %v798 = vunpack.c.l.b16 %v279
    %v799 = vunpack.c.l.b16 %v280
    %v800 = vunpack.c.l.b16 %v281
    %v801 = vunpack.c.l.b16 %v282
    %v802 = vunpack.c.l.b16 %v283
    %v803 = vunpack.c.l.b16 %v284
    %v804 = vunpack.c.l.b16 %v285
    %v805 = vunpack.c.l.b16 %v286
    %v806 = vunpack.c.l.b16 %v287
    %v807 = vunpack.c.l.b16 %v288
    %v808 = vunpack.c.l.b16 %v289
    %v809 = vunpack.c.l.b16 %v290
    %v810 = vunpack.c.l.b16 %v291
    %v811 = vunpack.c.l.b16 %v292
    %v812 = vunpack.c.l.b16 %v293
    %v813 = vunpack.c.l.b16 %v294
    %v814 = vunpack.c.l.b16 %v295
    %v815 = vunpack.c.l.b16 %v296
    %v816 = vunpack.c.l.b16 %v297
    %v817 = vunpack.c.l.b16 %v298
    %v818 = vunpack.c.l.b16 %v299
    %v819 = vunpack.c.l.b16 %v300
    %v820 = vunpack.c.l.b16 %v301
    %v821 = vunpack.c.l.b16 %v302
    %v822 = vunpack.c.l.b16 %v303
    %v823 = vunpack.c.l.b16 %v304
    %v824 = vunpack.c.l.b16 %v305
    %v825 = vunpack.c.l.b16 %v306
    %v826 = vunpack.c.l.b16 %v307
    %v827 = vunpack.c.l.b16 %v308
    %v828 = vunpack.c.l.b16 %v309
    %v829 = vunpack.c.l.b16 %v310
    %v830 = vunpack.c.l.b16 %v311
    %v831 = vunpack.c.l.b16 %v312
    %v832 = vunpack.c.l.b16 %v313
    %v833 = vunpack.c.l.b16 %v314
    %v834 = vunpack.c.l.b16 %v315
    %v835 = vunpack.c.l.b16 %v316
    %v836 = vunpack.c.l.b16 %v317
    %v837 = vunpack.c.l.b16 %v318
    %v838 = vunpack.c.l.b16 %v319
    %v839 = vunpack.c.l.b16 %v320
    %v840 = vunpack.c.l.b16 %v321
    %v841 = vunpack.c.l.b16 %v322
    %v842 = vunpack.c.l.b16 %v323
    %v843 = vunpack.c.l.b16 %v324
    %v844 = vunpack.c.l.b16 %v325
    %v845 = vunpack.c.l.b16 %v326
    %v846 = vunpack.c.l.b16 %v327
    %v847 = vunpack.c.l.b16 %v328
    %v848 = vunpack.c.l.b16 %v329
    %v849 = vunpack.c.l.b16 %v330
    %v850 = vunpack.c.l.b16 %v331
    %v851 = vunpack.c.l.b16 %v332
    %v852 = vunpack.c.l.b16 %v333
    %v853 = vunpack.c.l.b16 %v334
    %v854 = vunpack.c.l.b16 %v335
    %v855 = vunpack.c.l.b16 %v336
    %v856 = vunpack.c.l.b16 %v337
    %v857 = vunpack.c.l.b16 %v338
    %v858 = vunpack.c.l.b16 %v339
    %v859 = vunpack.c.l.b16 %v340
    %v860 = vunpack.c.l.b16 %v341
    %v861 = vunpack.c.l.b16 %v342
    %v862 = vunpack.c.l.b16 %v343
    %v863 = vunpack.c.l.b16 %v344
    %v864 = vunpack.c.l.b16 %v345
    %v865 = vunpack.c.l.b16 %v346
    %v866 = vunpack.c.l.b16 %v347
    %v867 = vunpack.c.l.b16 %v348
    %v868 = vunpack.c.l.b16 %v349
    %v869 = vunpack.c.l.b16 %v350
    %v870 = vunpack.c.l.b16 %v351
    %v871 = vunpack.c.l.b16 %v352
    %v872 = vunpack.c.l.b16 %v353
    %v873 = vunpack.c.l.b16 %v354
    %v874 = vunpack.c.l.b16 %v355
    %v875 = vunpack.c.l.b16 %v356
    %v876 = vunpack.c.l.b16 %v357
    %v877 = vunpack.c.l.b16 %v358
    %v878 = vunpack.c.l.b16 %v359
    %v879 = vunpack.c.l.b16 %v360
    %v880 = vunpack.c.l.b16 %v361
    %v881 = vunpack.c.l.b16 %v362
    %v882 = vunpack.c.l.b16 %v363
    %v883 = vunpack.c.l.b16 %v364
    %v884 = vunpack.c.l.b16 %v365
    %v885 = vunpack.c.l.b16 %v366
    %v886 = vunpack.c.l.b16 %v367
    %v887 = vunpack.c.l.b16 %v368
    %v888 = vunpack.c.l.b16 %v369
    %v889 = vunpack.c.l.b16 %v370
    %v890 = vunpack.c.l.b16 %v371
    %v891 = vunpack.c.l.b16 %v372
    %v892 = vunpack.c.l.b16 %v373
    %v893 = vunpack.c.l.b16 %v374
    %v894 = vunpack.c.l.b16 %v375
    %v895 = vunpack.c.l.b16 %v376
    %v896 = vunpack.c.l.b16 %v377
    %v897 = vunpack.c.l.b16 %v378
    %v898 = vunpack.c.l.b16 %v379
    %v899 = vpack.c.b16 %v644, %v643
    %v900 = vpack.c.b16 %v646, %v645
    %v901 = vpack.c.b16 %v648, %v647
    %v902 = vpack.c.b16 %v650, %v649
    %v903 = vpack.c.b16 %v652, %v651
    %v904 = vpack.c.b16 %v654, %v653
    %v905 = vpack.c.b16 %v656, %v655
    %v906 = vpack.c.b16 %v658, %v657
    %v907 = vpack.c.b16 %v660, %v659
    %v908 = vpack.c.b16 %v662, %v661
    %v909 = vpack.c.b16 %v664, %v663
    %v910 = vpack.c.b16 %v666, %v665
    %v911 = vpack.c.b16 %v668, %v667
    %v912 = vpack.c.b16 %v670, %v669
    %v913 = vpack.c.b16 %v672, %v671
    %v914 = vpack.c.b16 %v674, %v673
    %v915 = vpack.c.b16 %v676, %v675
    %v916 = vpack.c.b16 %v678, %v677
    %v917 = vpack.c.b16 %v680, %v679
    %v918 = vpack.c.b16 %v682, %v681
    %v919 = vpack.c.b16 %v684, %v683
    %v920 = vpack.c.b16 %v686, %v685
    %v921 = vpack.c.b16 %v688, %v687
    %v922 = vpack.c.b16 %v690, %v689
    %v923 = vpack.c.b16 %v692, %v691
    %v924 = vpack.c.b16 %v694, %v693
    %v925 = vpack.c.b16 %v696, %v695
    %v926 = vpack.c.b16 %v698, %v697
    %v927 = vpack.c.b16 %v700, %v699
    %v928 = vpack.c.b16 %v702, %v701
    %v929 = vpack.c.b16 %v704, %v703
    %v930 = vpack.c.b16 %v706, %v705
    %v931 = vpack.c.b16 %v708, %v707
    %v932 = vpack.c.b16 %v710, %v709
    %v933 = vpack.c.b16 %v712, %v711
    %v934 = vpack.c.b16 %v714, %v713
    %v935 = vpack.c.b16 %v716, %v715
    %v936 = vpack.c.b16 %v718, %v717
    %v937 = vpack.c.b16 %v720, %v719
    %v938 = vpack.c.b16 %v722, %v721
    %v939 = vpack.c.b16 %v724, %v723
    %v940 = vpack.c.b16 %v726, %v725
    %v941 = vpack.c.b16 %v728, %v727
    %v942 = vpack.c.b16 %v730, %v729
    %v943 = vpack.c.b16 %v732, %v731
    %v944 = vpack.c.b16 %v734, %v733
    %v945 = vpack.c.b16 %v736, %v735
    %v946 = vpack.c.b16 %v738, %v737
    %v947 = vpack.c.b16 %v740, %v739
    %v948 = vpack.c.b16 %v742, %v741
    %v949 = vpack.c.b16 %v744, %v743
    %v950 = vpack.c.b16 %v746, %v745
    %v951 = vpack.c.b16 %v748, %v747
    %v952 = vpack.c.b16 %v750, %v749
    %v953 = vpack.c.b16 %v752, %v751
    %v954 = vpack.c.b16 %v754, %v753
    %v955 = vpack.c.b16 %v756, %v755
    %v956 = vpack.c.b16 %v758, %v757
    %v957 = vpack.c.b16 %v760, %v759
    %v958 = vpack.c.b16 %v762, %v761
    %v959 = vpack.c.b16 %v764, %v763
    %v960 = vpack.c.b16 %v766, %v765
    %v961 = vpack.c.b16 %v768, %v767
    %v962 = vpack.c.b16 %v770, %v769
    %v963 = vpack.c.b16 %v772, %v771
    %v964 = vpack.c.b16 %v774, %v773
    %v965 = vpack.c.b16 %v776, %v775
    %v966 = vpack.c.b16 %v778, %v777
    %v967 = vpack.c.b16 %v780, %v779
    %v968 = vpack.c.b16 %v782, %v781
    %v969 = vpack.c.b16 %v784, %v783
    %v970 = vpack.c.b16 %v786, %v785
    %v971 = vpack.c.b16 %v788, %v787
    %v972 = vpack.c.b16 %v790, %v789
    %v973 = vpack.c.b16 %v792, %v791
    %v974 = vpack.c.b16 %v794, %v793
    %v975 = vpack.c.b16 %v796, %v795
    %v976 = vpack.c.b16 %v798, %v797
    %v977 = vpack.c.b16 %v800, %v799
    %v978 = vpack.c.b16 %v802, %v801
    %v979 = vpack.c.b16 %v804, %v803
    %v980 = vpack.c.b16 %v806, %v805
    %v981 = vpack.c.b16 %v808, %v807
    %v982 = vpack.c.b16 %v810, %v809
    %v983 = vpack.c.b16 %v812, %v811
    %v984 = vpack.c.b16 %v814, %v813
    %v985 = vpack.c.b16 %v816, %v815
    %v986 = vpack.c.b16 %v818, %v817
    %v987 = vpack.c.b16 %v820, %v819
    %v988 = vpack.c.b16 %v822, %v821
    %v989 = vpack.c.b16 %v824, %v823
    %v990 = vpack.c.b16 %v826, %v825
    %v991 = vpack.c.b16 %v828, %v827
    %v992 = vpack.c.b16 %v830, %v829
    %v993 = vpack.c.b16 %v832, %v831
    %v994 = vpack.c.b16 %v834, %v833
    %v995 = vpack.c.b16 %v836, %v835
    %v996 = vpack.c.b16 %v838, %v837
    %v997 = vpack.c.b16 %v840, %v839
    %v998 = vpack.c.b16 %v842, %v841
    %v999 = vpack.c.b16 %v844, %v843
    %v1000 = vpack.c.b16 %v846, %v845
    %v1001 = vpack.c.b16 %v848, %v847
    %v1002 = vpack.c.b16 %v850, %v849
    %v1003 = vpack.c.b16 %v852, %v851
    %v1004 = vpack.c.b16 %v854, %v853
    %v1005 = vpack.c.b16 %v856, %v855
    %v1006 = vpack.c.b16 %v858, %v857
    %v1007 = vpack.c.b16 %v860, %v859
    %v1008 = vpack.c.b16 %v862, %v861
    %v1009 = vpack.c.b16 %v864, %v863
    %v1010 = vpack.c.b16 %v866, %v865
    %v1011 = vpack.c.b16 %v868, %v867
    %v1012 = vpack.c.b16 %v870, %v869
    %v1013 = vpack.c.b16 %v872, %v871
    %v1014 = vpack.c.b16 %v874, %v873
    %v1015 = vpack.c.b16 %v876, %v875
    %v1016 = vpack.c.b16 %v878, %v877
    %v1017 = vpack.c.b16 %v880, %v879
    %v1018 = vpack.c.b16 %v882, %v881
    %v1019 = vpack.c.b16 %v884, %v883
    %v1020 = vpack.c.b16 %v886, %v885
    %v1021 = vpack.c.b16 %v888, %v887
    %v1022 = vpack.c.b16 %v890, %v889
    %v1023 = vpack.c.b16 %v892, %v891
    %v1024 = vpack.c.b16 %v894, %v893
    %v1025 = vpack.c.b16 %v896, %v895
    %v1026 = vpack.c.b16 %v898, %v897
    %1155 = vmatprep.subr.bf16.mxu0 0
    %1156 = vmatpush1.bf16.msra.mxu0 %v906
    %1157 = vmatprep.subr.bf16.mxu0 0
    %1158 = vmatpush1.bf16.msra.mxu0 %v905
    %1159 = vmatprep.subr.bf16.mxu0 0
    %1160 = vmatpush1.bf16.msra.mxu0 %v904
    %1161 = vmatprep.subr.bf16.mxu0 0
    %1162 = vmatpush1.bf16.msra.mxu0 %v903
    %1163 = vmatprep.subr.bf16.mxu0 0
    %1164 = vmatpush1.bf16.msra.mxu0 %v902
    %1165 = vmatprep.subr.bf16.mxu0 0
    %1166 = vmatpush1.bf16.msra.mxu0 %v901
    %1167 = vmatprep.subr.bf16.mxu0 0
    %1168 = vmatpush1.bf16.msra.mxu0 %v900
    %1169 = vmatprep.subr.bf16.mxu0 0
    %1170 = vmatpush1.bf16.msra.mxu0 %v899
    %1171 = vmatprep.subr.bf16.mxu0 0
    %1172 = vmatpush2.bf16.msra.mxu0 %v914
    %1173 = vmatprep.subr.bf16.mxu0 0
    %1174 = vmatpush2.bf16.msra.mxu0 %v913
    %1175 = vmatprep.subr.bf16.mxu0 0
    %1176 = vmatpush2.bf16.msra.mxu0 %v912
    %1177 = vmatprep.subr.bf16.mxu0 0
    %1178 = vmatpush2.bf16.msra.mxu0 %v911
    %1179 = vmatprep.subr.bf16.mxu0 0
    %1180 = vmatpush2.bf16.msra.mxu0 %v910
    %1181 = vmatprep.subr.bf16.mxu0 0
    %1182 = vmatpush2.bf16.msra.mxu0 %v909
    %1183 = vmatprep.subr.bf16.mxu0 0
    %1184 = vmatpush2.bf16.msra.mxu0 %v908
    %1185 = vmatprep.subr.bf16.mxu0 0
    %1186 = vmatpush2.bf16.msra.mxu0 %v907
    %1187 = vmatprep.mubr.bf16.mxu0 %v109
    %1188 = vmatmul.mubr.bf16.gmra.mxu0 %v108
    %v1189 = vpop.f32.mrf.mxu0
    %v1190 = vadd.f32 %v385, %v1189
    %v1191 = vpop.f32.mrf.mxu0
    %v1192 = vpop.f32.mrf.mxu0
    %v1193 = vpop.f32.mrf.mxu0
    %1194 = vdwg.mxu0
    %1195 = vmatprep.subr.bf16.mxu0 0
    %1196 = vmatpush1.bf16.msra.mxu0 %v922
    %1197 = vmatprep.subr.bf16.mxu0 0
    %1198 = vmatpush1.bf16.msra.mxu0 %v921
    %1199 = vmatprep.subr.bf16.mxu0 0
    %1200 = vmatpush1.bf16.msra.mxu0 %v920
    %1201 = vmatprep.subr.bf16.mxu0 0
    %1202 = vmatpush1.bf16.msra.mxu0 %v919
    %1203 = vmatprep.subr.bf16.mxu0 0
    %1204 = vmatpush1.bf16.msra.mxu0 %v918
    %1205 = vmatprep.subr.bf16.mxu0 0
    %1206 = vmatpush1.bf16.msra.mxu0 %v917
    %1207 = vmatprep.subr.bf16.mxu0 0
    %1208 = vmatpush1.bf16.msra.mxu0 %v916
    %1209 = vmatprep.subr.bf16.mxu0 0
    %1210 = vmatpush1.bf16.msra.mxu0 %v915
    %1211 = vmatprep.subr.bf16.mxu0 0
    %1212 = vmatpush2.bf16.msra.mxu0 %v930
    %1213 = vmatprep.subr.bf16.mxu0 0
    %1214 = vmatpush2.bf16.msra.mxu0 %v929
    %1215 = vmatprep.subr.bf16.mxu0 0
    %1216 = vmatpush2.bf16.msra.mxu0 %v928
    %1217 = vmatprep.subr.bf16.mxu0 0
    %1218 = vmatpush2.bf16.msra.mxu0 %v927
    %1219 = vmatprep.subr.bf16.mxu0 0
    %1220 = vmatpush2.bf16.msra.mxu0 %v926
    %1221 = vmatprep.subr.bf16.mxu0 0
    %1222 = vmatpush2.bf16.msra.mxu0 %v925
    %1223 = vmatprep.subr.bf16.mxu0 0
    %1224 = vmatpush2.bf16.msra.mxu0 %v924
    %1225 = vmatprep.subr.bf16.mxu0 0
    %1226 = vmatpush2.bf16.msra.mxu0 %v923
    %1227 = vmatprep.mubr.bf16.mxu0 %v111
    %1228 = vmatmul.mubr.bf16.gmra.mxu0 %v110
    %v1229 = vpop.f32.mrf.mxu0
    %v1230 = vadd.f32 %v1190, %v1229
    %v1231 = vpop.f32.mrf.mxu0
    %v1232 = vpop.f32.mrf.mxu0
    %v1233 = vpop.f32.mrf.mxu0
    %1234 = vdwg.mxu0
    %1235 = vmatprep.subr.bf16.mxu0 0
    %1236 = vmatpush1.bf16.msra.mxu0 %v938
    %1237 = vmatprep.subr.bf16.mxu0 0
    %1238 = vmatpush1.bf16.msra.mxu0 %v937
    %1239 = vmatprep.subr.bf16.mxu0 0
    %1240 = vmatpush1.bf16.msra.mxu0 %v936
    %1241 = vmatprep.subr.bf16.mxu0 0
    %1242 = vmatpush1.bf16.msra.mxu0 %v935
    %1243 = vmatprep.subr.bf16.mxu0 0
    %1244 = vmatpush1.bf16.msra.mxu0 %v934
    %1245 = vmatprep.subr.bf16.mxu0 0
    %1246 = vmatpush1.bf16.msra.mxu0 %v933
    %1247 = vmatprep.subr.bf16.mxu0 0
    %1248 = vmatpush1.bf16.msra.mxu0 %v932
    %1249 = vmatprep.subr.bf16.mxu0 0
    %1250 = vmatpush1.bf16.msra.mxu0 %v931
    %1251 = vmatprep.subr.bf16.mxu0 0
    %1252 = vmatpush2.bf16.msra.mxu0 %v946
    %1253 = vmatprep.subr.bf16.mxu0 0
    %1254 = vmatpush2.bf16.msra.mxu0 %v945
    %1255 = vmatprep.subr.bf16.mxu0 0
    %1256 = vmatpush2.bf16.msra.mxu0 %v944
    %1257 = vmatprep.subr.bf16.mxu0 0
    %1258 = vmatpush2.bf16.msra.mxu0 %v943
    %1259 = vmatprep.subr.bf16.mxu0 0
    %1260 = vmatpush2.bf16.msra.mxu0 %v942
    %1261 = vmatprep.subr.bf16.mxu0 0
    %1262 = vmatpush2.bf16.msra.mxu0 %v941
    %1263 = vmatprep.subr.bf16.mxu0 0
    %1264 = vmatpush2.bf16.msra.mxu0 %v940
    %1265 = vmatprep.subr.bf16.mxu0 0
    %1266 = vmatpush2.bf16.msra.mxu0 %v939
    %1267 = vmatprep.mubr.bf16.mxu0 %v113
    %1268 = vmatmul.mubr.bf16.gmra.mxu0 %v112
    %v1269 = vpop.f32.mrf.mxu0
    %v1270 = vadd.f32 %v1230, %v1269
    %v1271 = vpop.f32.mrf.mxu0
    %v1272 = vpop.f32.mrf.mxu0
    %v1273 = vpop.f32.mrf.mxu0
    %1274 = vdwg.mxu0
    %1275 = vmatprep.subr.bf16.mxu0 0
    %1276 = vmatpush1.bf16.msra.mxu0 %v954
    %1277 = vmatprep.subr.bf16.mxu0 0
    %1278 = vmatpush1.bf16.msra.mxu0 %v953
    %1279 = vmatprep.subr.bf16.mxu0 0
    %1280 = vmatpush1.bf16.msra.mxu0 %v952
    %1281 = vmatprep.subr.bf16.mxu0 0
    %1282 = vmatpush1.bf16.msra.mxu0 %v951
    %1283 = vmatprep.subr.bf16.mxu0 0
    %1284 = vmatpush1.bf16.msra.mxu0 %v950
    %1285 = vmatprep.subr.bf16.mxu0 0
    %1286 = vmatpush1.bf16.msra.mxu0 %v949
    %1287 = vmatprep.subr.bf16.mxu0 0
    %1288 = vmatpush1.bf16.msra.mxu0 %v948
    %1289 = vmatprep.subr.bf16.mxu0 0
    %1290 = vmatpush1.bf16.msra.mxu0 %v947
    %1291 = vmatprep.subr.bf16.mxu0 0
    %1292 = vmatpush2.bf16.msra.mxu0 %v962
    %1293 = vmatprep.subr.bf16.mxu0 0
    %1294 = vmatpush2.bf16.msra.mxu0 %v961
    %1295 = vmatprep.subr.bf16.mxu0 0
    %1296 = vmatpush2.bf16.msra.mxu0 %v960
    %1297 = vmatprep.subr.bf16.mxu0 0
    %1298 = vmatpush2.bf16.msra.mxu0 %v959
    %1299 = vmatprep.subr.bf16.mxu0 0
    %1300 = vmatpush2.bf16.msra.mxu0 %v958
    %1301 = vmatprep.subr.bf16.mxu0 0
    %1302 = vmatpush2.bf16.msra.mxu0 %v957
    %1303 = vmatprep.subr.bf16.mxu0 0
    %1304 = vmatpush2.bf16.msra.mxu0 %v956
    %1305 = vmatprep.subr.bf16.mxu0 0
    %1306 = vmatpush2.bf16.msra.mxu0 %v955
    %1307 = vmatprep.mubr.bf16.mxu0 %v115
    %1308 = vmatmul.mubr.bf16.gmra.mxu0 %v114
    %v1309 = vpop.f32.mrf.mxu0
    %v1310 = vadd.f32 %v1270, %v1309
    %v1311 = vpop.f32.mrf.mxu0
    %v1312 = vpop.f32.mrf.mxu0
    %v1313 = vpop.f32.mrf.mxu0
    %1314 = vdwg.mxu0
    %1315 = vmatprep.subr.bf16.mxu0 0
    %1316 = vmatpush1.bf16.msra.mxu0 %v970
    %1317 = vmatprep.subr.bf16.mxu0 0
    %1318 = vmatpush1.bf16.msra.mxu0 %v969
    %1319 = vmatprep.subr.bf16.mxu0 0
    %1320 = vmatpush1.bf16.msra.mxu0 %v968
    %1321 = vmatprep.subr.bf16.mxu0 0
    %1322 = vmatpush1.bf16.msra.mxu0 %v967
    %1323 = vmatprep.subr.bf16.mxu0 0
    %1324 = vmatpush1.bf16.msra.mxu0 %v966
    %1325 = vmatprep.subr.bf16.mxu0 0
    %1326 = vmatpush1.bf16.msra.mxu0 %v965
    %1327 = vmatprep.subr.bf16.mxu0 0
    %1328 = vmatpush1.bf16.msra.mxu0 %v964
    %1329 = vmatprep.subr.bf16.mxu0 0
    %1330 = vmatpush1.bf16.msra.mxu0 %v963
    %1331 = vmatprep.subr.bf16.mxu0 0
    %1332 = vmatpush2.bf16.msra.mxu0 %v978
    %1333 = vmatprep.subr.bf16.mxu0 0
    %1334 = vmatpush2.bf16.msra.mxu0 %v977
    %1335 = vmatprep.subr.bf16.mxu0 0
    %1336 = vmatpush2.bf16.msra.mxu0 %v976
    %1337 = vmatprep.subr.bf16.mxu0 0
    %1338 = vmatpush2.bf16.msra.mxu0 %v975
    %1339 = vmatprep.subr.bf16.mxu0 0
    %1340 = vmatpush2.bf16.msra.mxu0 %v974
    %1341 = vmatprep.subr.bf16.mxu0 0
    %1342 = vmatpush2.bf16.msra.mxu0 %v973
    %1343 = vmatprep.subr.bf16.mxu0 0
    %1344 = vmatpush2.bf16.msra.mxu0 %v972
    %1345 = vmatprep.subr.bf16.mxu0 0
    %1346 = vmatpush2.bf16.msra.mxu0 %v971
    %1347 = vmatprep.mubr.bf16.mxu0 %v117
    %1348 = vmatmul.mubr.bf16.gmra.mxu0 %v116
    %v1349 = vpop.f32.mrf.mxu0
    %v1350 = vadd.f32 %v1310, %v1349
    %v1351 = vpop.f32.mrf.mxu0
    %v1352 = vpop.f32.mrf.mxu0
    %v1353 = vpop.f32.mrf.mxu0
    %1354 = vdwg.mxu0
    %1355 = vmatprep.subr.bf16.mxu0 0
    %1356 = vmatpush1.bf16.msra.mxu0 %v986
    %1357 = vmatprep.subr.bf16.mxu0 0
    %1358 = vmatpush1.bf16.msra.mxu0 %v985
    %1359 = vmatprep.subr.bf16.mxu0 0
    %1360 = vmatpush1.bf16.msra.mxu0 %v984
    %1361 = vmatprep.subr.bf16.mxu0 0
    %1362 = vmatpush1.bf16.msra.mxu0 %v983
    %1363 = vmatprep.subr.bf16.mxu0 0
    %1364 = vmatpush1.bf16.msra.mxu0 %v982
    %1365 = vmatprep.subr.bf16.mxu0 0
    %1366 = vmatpush1.bf16.msra.mxu0 %v981
    %1367 = vmatprep.subr.bf16.mxu0 0
    %1368 = vmatpush1.bf16.msra.mxu0 %v980
    %1369 = vmatprep.subr.bf16.mxu0 0
    %1370 = vmatpush1.bf16.msra.mxu0 %v979
    %1371 = vmatprep.subr.bf16.mxu0 0
    %1372 = vmatpush2.bf16.msra.mxu0 %v994
    %1373 = vmatprep.subr.bf16.mxu0 0
    %1374 = vmatpush2.bf16.msra.mxu0 %v993
    %1375 = vmatprep.subr.bf16.mxu0 0
    %1376 = vmatpush2.bf16.msra.mxu0 %v992
    %1377 = vmatprep.subr.bf16.mxu0 0
    %1378 = vmatpush2.bf16.msra.mxu0 %v991
    %1379 = vmatprep.subr.bf16.mxu0 0
    %1380 = vmatpush2.bf16.msra.mxu0 %v990
    %1381 = vmatprep.subr.bf16.mxu0 0
    %1382 = vmatpush2.bf16.msra.mxu0 %v989
    %1383 = vmatprep.subr.bf16.mxu0 0
    %1384 = vmatpush2.bf16.msra.mxu0 %v988
    %1385 = vmatprep.subr.bf16.mxu0 0
    %1386 = vmatpush2.bf16.msra.mxu0 %v987
    %1387 = vmatprep.mubr.bf16.mxu0 %v119
    %1388 = vmatmul.mubr.bf16.gmra.mxu0 %v118
    %v1389 = vpop.f32.mrf.mxu0
    %v1390 = vadd.f32 %v1350, %v1389
    %v1391 = vpop.f32.mrf.mxu0
    %v1392 = vpop.f32.mrf.mxu0
    %v1393 = vpop.f32.mrf.mxu0
    %1394 = vdwg.mxu0
    %1395 = vmatprep.subr.bf16.mxu0 0
    %1396 = vmatpush1.bf16.msra.mxu0 %v1002
    %1397 = vmatprep.subr.bf16.mxu0 0
    %1398 = vmatpush1.bf16.msra.mxu0 %v1001
    %1399 = vmatprep.subr.bf16.mxu0 0
    %1400 = vmatpush1.bf16.msra.mxu0 %v1000
    %1401 = vmatprep.subr.bf16.mxu0 0
    %1402 = vmatpush1.bf16.msra.mxu0 %v999
    %1403 = vmatprep.subr.bf16.mxu0 0
    %1404 = vmatpush1.bf16.msra.mxu0 %v998
    %1405 = vmatprep.subr.bf16.mxu0 0
    %1406 = vmatpush1.bf16.msra.mxu0 %v997
    %1407 = vmatprep.subr.bf16.mxu0 0
    %1408 = vmatpush1.bf16.msra.mxu0 %v996
    %1409 = vmatprep.subr.bf16.mxu0 0
    %1410 = vmatpush1.bf16.msra.mxu0 %v995
    %1411 = vmatprep.subr.bf16.mxu0 0
    %1412 = vmatpush2.bf16.msra.mxu0 %v1010
    %1413 = vmatprep.subr.bf16.mxu0 0
    %1414 = vmatpush2.bf16.msra.mxu0 %v1009
    %1415 = vmatprep.subr.bf16.mxu0 0
    %1416 = vmatpush2.bf16.msra.mxu0 %v1008
    %1417 = vmatprep.subr.bf16.mxu0 0
    %1418 = vmatpush2.bf16.msra.mxu0 %v1007
    %1419 = vmatprep.subr.bf16.mxu0 0
    %1420 = vmatpush2.bf16.msra.mxu0 %v1006
    %1421 = vmatprep.subr.bf16.mxu0 0
    %1422 = vmatpush2.bf16.msra.mxu0 %v1005
    %1423 = vmatprep.subr.bf16.mxu0 0
    %1424 = vmatpush2.bf16.msra.mxu0 %v1004
    %1425 = vmatprep.subr.bf16.mxu0 0
    %1426 = vmatpush2.bf16.msra.mxu0 %v1003
    %1427 = vmatprep.mubr.bf16.mxu0 %v121
    %1428 = vmatmul.mubr.bf16.gmra.mxu0 %v120
    %v1429 = vpop.f32.mrf.mxu0
    %v1430 = vadd.f32 %v1390, %v1429
    %v1431 = vpop.f32.mrf.mxu0
    %v1432 = vpop.f32.mrf.mxu0
    %v1433 = vpop.f32.mrf.mxu0
    %1434 = vdwg.mxu0
    %1435 = vmatprep.subr.bf16.mxu0 0
    %1436 = vmatpush1.bf16.msra.mxu0 %v1018
    %1437 = vmatprep.subr.bf16.mxu0 0
    %1438 = vmatpush1.bf16.msra.mxu0 %v1017
    %1439 = vmatprep.subr.bf16.mxu0 0
    %1440 = vmatpush1.bf16.msra.mxu0 %v1016
    %1441 = vmatprep.subr.bf16.mxu0 0
    %1442 = vmatpush1.bf16.msra.mxu0 %v1015
    %1443 = vmatprep.subr.bf16.mxu0 0
    %1444 = vmatpush1.bf16.msra.mxu0 %v1014
    %1445 = vmatprep.subr.bf16.mxu0 0
    %1446 = vmatpush1.bf16.msra.mxu0 %v1013
    %1447 = vmatprep.subr.bf16.mxu0 0
    %1448 = vmatpush1.bf16.msra.mxu0 %v1012
    %1449 = vmatprep.subr.bf16.mxu0 0
    %1450 = vmatpush1.bf16.msra.mxu0 %v1011
    %1451 = vmatprep.subr.bf16.mxu0 0
    %1452 = vmatpush2.bf16.msra.mxu0 %v1026
    %1453 = vmatprep.subr.bf16.mxu0 0
    %1454 = vmatpush2.bf16.msra.mxu0 %v1025
    %1455 = vmatprep.subr.bf16.mxu0 0
    %1456 = vmatpush2.bf16.msra.mxu0 %v1024
    %1457 = vmatprep.subr.bf16.mxu0 0
    %1458 = vmatpush2.bf16.msra.mxu0 %v1023
    %1459 = vmatprep.subr.bf16.mxu0 0
    %1460 = vmatpush2.bf16.msra.mxu0 %v1022
    %1461 = vmatprep.subr.bf16.mxu0 0
    %1462 = vmatpush2.bf16.msra.mxu0 %v1021
    %1463 = vmatprep.subr.bf16.mxu0 0
    %1464 = vmatpush2.bf16.msra.mxu0 %v1020
    %1465 = vmatprep.subr.bf16.mxu0 0
    %1466 = vmatpush2.bf16.msra.mxu0 %v1019
    %1467 = vmatprep.mubr.bf16.mxu0 %v123
    %1468 = vmatmul.mubr.bf16.gmra.mxu0 %v122
    %v1469 = vpop.f32.mrf.mxu0
    %v1470 = vadd.f32 %v1430, %v1469
    %v1471 = vpop.f32.mrf.mxu0
    %v1472 = vpop.f32.mrf.mxu0
    %v1473 = vpop.f32.mrf.mxu0
    %1474 = vdwg.mxu0
    %1475 = vst [vmem:[#allocation2] sm:$0x3] %v1470
    // Predicated region
    $region14: #{netc_forward.3} parent=1 // pred_check
      _
    $region15: #{netc_forward.3} parent=1 // pred_check_branch
      %1477 = sbr.rel (0) target = $region17
    $region16: #{netc_forward.3} parent=1 // pred_region
      %s1479 = ssub.s32 32, 32
      %1480 = vsyncadd [#allocation3], %s1479
      %s1482 = sshll.u32 [#allocation2], 4
      %s1483 = int_to_ptr.vmem [resolvable:$true] %s1482
      %1485 = dma.vmem_to_hbm [thread:$0]  %s1483, 32, %s3, [#allocation3]
    $region17: #{netc_forward.3} parent=1 // pred_fallthru
      _
    // Predicated region
    $region18: #{netc_forward.3} parent=1 // pred_check
      _
    $region19: #{netc_forward.3} parent=1 // pred_check_branch
      %1487 = sbr.rel (0) target = $region21
    $region20: #{netc_forward.3} parent=1 // pred_region
      %1488 = dma.done [#allocation3], 32
    $region21: #{netc_forward.3} parent=1 // pred_fallthru
      _
    %1489 = vsyncpa [#allocation3], 1

</llo_original>
